<compile_context>
chip_gen: v7x
topology: tpu7x:2x2x1
jax: 0.10.0
libtpu: 0.0.40
codegen_flags: <defaults>
</compile_context>

<pallas_src>
import functools

import jax
import jax.numpy as jnp
from jax import lax
from jax.experimental import pallas as pl
from jax.experimental.pallas import tpu as pltpu


def _round_up(x, m):
    return (x + m - 1) // m * m


def _vmem_budget_bytes():
    cap = 128 * 1024 * 1024
    try:
        info = pltpu.get_tpu_info()
        for name in ("vmem_capacity_bytes", "vmem_size_bytes", "vmem_bytes"):
            v = getattr(info, name, None)
            if v:
                cap = int(v)
                break
    except Exception:
        pass
    # ~3/4 of physical, capped at 100 MiB: ~48 MiB on v7x, ~96 MiB on v5e/v6e.
    return min(cap * 3 // 4, 100 * 1024 * 1024)


_VMEM_LIMIT = _vmem_budget_bytes()


def _sigmoid(x):
    # Exact identity; guarantees a single EUP op (tanh) per gate instead of
    # a possible exp + divide lowering.
    return 0.5 * jnp.tanh(0.5 * x) + 0.5


def _bilstm_maxpool_kernel(xf_ref, xb_ref,
                           wih_f_ref, wih_b_ref, whh_f_ref, whh_b_ref,
                           bias_f_ref, bias_b_ref,
                           fcw_f_ref, fcw_b_ref, fcb_ref,
                           out_ref,
                           gif_scr, gib_scr,
                           hf_scr, cf_scr, mxf_scr,
                           hb_scr, cb_scr, mxb_scr,
                           *, chunk, bt, hidden, seq_len, seq_pad,
                           needs_mask, unroll):
    """One grid step = one (batch-tile, time-chunk) of the fused bi-LSTM recurrence.

    Layouts:
      gates (per direction): (Bt, Gp) with [i|f|g|o] packed contiguously, Gp=round_up(4H,128)
      state h/c/max        : (Bt, H) per direction, carried in VMEM scratch across chunks
    """
    i = pl.program_id(1)                 # time-chunk index (axis 1 == "arbitrary")
    n_chunks = pl.num_programs(1)
    H = hidden
    C = chunk

    @pl.when(i == 0)
    def _init():
        hf_scr[...] = jnp.zeros_like(hf_scr)
        cf_scr[...] = jnp.zeros_like(cf_scr)
        hb_scr[...] = jnp.zeros_like(hb_scr)
        cb_scr[...] = jnp.zeros_like(cb_scr)
        neg = jnp.finfo(jnp.float32).min
        mxf_scr[...] = jnp.full_like(mxf_scr, neg)
        mxb_scr[...] = jnp.full_like(mxb_scr, neg)

    # Hoisted input projection: one MXU GEMM per direction per chunk, off the
    # serial chain, bias folded in, f32 accumulation.
    gif_scr[...] = (jnp.dot(xf_ref[...], wih_f_ref[...],
                            preferred_element_type=jnp.float32) + bias_f_ref[...])
    gib_scr[...] = (jnp.dot(xb_ref[...], wih_b_ref[...],
                            preferred_element_type=jnp.float32) + bias_b_ref[...])

    whh_f = whh_f_ref[...]
    whh_b = whh_b_ref[...]

    def dir_step(g_row, whh, h, c, mx, valid):
        gates = g_row + jnp.dot(h.astype(whh.dtype), whh,
                                preferred_element_type=jnp.float32)
        i_g = _sigmoid(gates[:, 0 * H:1 * H])
        f_g = _sigmoid(gates[:, 1 * H:2 * H])
        g_g = jnp.tanh(gates[:, 2 * H:3 * H])
        o_g = _sigmoid(gates[:, 3 * H:4 * H])
        c_new = f_g * c + i_g * g_g
        h_new = o_g * jnp.tanh(c_new)
        mx_new = jnp.maximum(mx, h_new)
        if valid is not None:          # static: only emitted on edge chunks
            h_new = jnp.where(valid, h_new, h)
            c_new = jnp.where(valid, c_new, c)
            mx_new = jnp.where(valid, mx_new, mx)
        return h_new, c_new, mx_new

    def run_chunk(masked):
        def body(t, carry):
            hf, cf, mxf, hb, cb, mxb = carry
            g = i * C + t                                   # global fwd-order step
            rf = pl.multiple_of(t * bt, bt)
            rb = pl.multiple_of((C - 1 - t) * bt, bt)       # backward reads reversed
            vf = (g < seq_len) if masked else None          # fwd: padded tail
            vb = (g >= seq_pad - seq_len) if masked else None  # bwd: padded head
            hf, cf, mxf = dir_step(gif_scr[pl.ds(rf, bt), :], whh_f,
                                   hf, cf, mxf, vf)
            hb, cb, mxb = dir_step(gib_scr[pl.ds(rb, bt), :], whh_b,
                                   hb, cb, mxb, vb)
            return hf, cf, mxf, hb, cb, mxb

        carry = (hf_scr[...], cf_scr[...], mxf_scr[...],
                 hb_scr[...], cb_scr[...], mxb_scr[...])
        hf, cf, mxf, hb, cb, mxb = lax.fori_loop(0, C, body, carry,
                                                 unroll=unroll)
        hf_scr[...] = hf
        cf_scr[...] = cf
        mxf_scr[...] = mxf
        hb_scr[...] = hb
        cb_scr[...] = cb
        mxb_scr[...] = mxb

    if needs_mask:
        # Only the first chunk (backward padded head) and the last chunk
        # (forward padded tail) ever need masking; middle chunks run clean.
        is_edge = jnp.logical_or(i == 0, i == n_chunks - 1)

        @pl.when(is_edge)
        def _masked():
            run_chunk(True)

        @pl.when(jnp.logical_not(is_edge))
        def _unmasked():
            run_chunk(False)
    else:
        run_chunk(False)

    @pl.when(i == n_chunks - 1)
    def _finish():
        mxf = mxf_scr[...]
        mxb = mxb_scr[...]
        out = (jnp.dot(mxf.astype(fcw_f_ref.dtype), fcw_f_ref[...],
                       preferred_element_type=jnp.float32)
               + jnp.dot(mxb.astype(fcw_b_ref.dtype), fcw_b_ref[...],
                         preferred_element_type=jnp.float32)
               + fcb_ref[...])
        out_ref[...] = out.astype(out_ref.dtype)


@functools.partial(jax.jit,
                   static_argnames=("seq_chunk", "batch_tile", "compute_dtype",
                                    "unroll"))
def lstm_maxpool_forward(text, params, *, seq_chunk=None, batch_tile=8,
                         compute_dtype=jnp.bfloat16, unroll=4):
    B, S = text.shape
    E = params["embedding"].shape[1]
    H = params["w_hh_f"].shape[1]
    O = params["fc_w"].shape[0]

    Gp = _round_up(4 * H, 128)              # per-direction gate lanes (no per-gate pad)
    Op = _round_up(max(O, 1), 128)          # lane-dense output store
    Bt = _round_up(min(max(batch_tile, 1), max(B, 1)), 8)   # batch tile (sublane mult)
    Bp = _round_up(max(B, 1), Bt)
    n_btiles = Bp // Bt

    xbytes = jnp.dtype(compute_dtype).itemsize

    # ---- VMEM-budgeted time-chunk size ----
    if seq_chunk is None:
        Ep = max(E, 128)  # lane-padded width of streamed x blocks in VMEM
        fixed = (2 * xbytes * (2 * E * Gp + 2 * H * Gp + 2 * H * Op)  # dbl-buffered weights
                 + 2 * 4 * (2 * Gp + Op)                              # dbl-buffered biases
                 + 2 * 4 * Bt * Op                                    # output block
                 + 6 * 4 * Bt * max(H, 128))                          # state scratch
        per_c = Bt * (2 * 4 * Gp            # gi scratch (f32, both directions)
                      + 2 * 2 * xbytes * Ep)  # 2 dirs x dbl-buffered x blocks
        avail = int(_VMEM_LIMIT * 0.8) - fixed
        C = max(8, min(512, avail // max(per_c, 1)))
    else:
        C = seq_chunk
    C = int(max(1, min(C, S)))

    S_pad = _round_up(S, C)
    n_chunks = S_pad // C
    needs_mask = (S_pad != S)

    # ---- embedding lookup + dropout(identity) stay in plain JAX (gather) ----
    text_p = jnp.pad(text, ((0, Bp - B), (0, 0)))                      # (Bp, S)
    emb = jnp.take(params["embedding"], text_p.T, axis=0)              # (S, Bp, E)
    emb = jnp.pad(emb.astype(jnp.float32), ((0, S_pad - S), (0, 0), (0, 0)))
    # Lay out as (n_chunks, n_btiles, C, Bt, E) flattened so each (batch-tile,
    # time-chunk) block is a contiguous (C*Bt, E) 2-D slab.  The SAME array is
    # read by both directions (no fwd/reversed duplication).
    x = emb.reshape(n_chunks, C, n_btiles, Bt, E).transpose(0, 2, 1, 3, 4)
    x = x.reshape(n_chunks * n_btiles * C * Bt, E).astype(compute_dtype)

    # ---- pack weights: per-direction, gates [i|f|g|o] contiguous, tail zero-pad ----
    def pack_dir(w_ih, w_hh, b_ih, b_hh):
        wih = jnp.zeros((E, Gp), jnp.float32).at[:, :4 * H].set(w_ih.T)
        whh = jnp.zeros((H, Gp), jnp.float32).at[:, :4 * H].set(w_hh.T)
        bias = jnp.zeros((1, Gp), jnp.float32).at[0, :4 * H].set(b_ih + b_hh)
        return wih.astype(compute_dtype), whh.astype(compute_dtype), bias

    wih_f, whh_f, b_f = pack_dir(params["w_ih_f"], params["w_hh_f"],
                                 params["b_ih_f"], params["b_hh_f"])
    wih_b, whh_b, b_b = pack_dir(params["w_ih_b"], params["w_hh_b"],
                                 params["b_ih_b"], params["b_hh_b"])

    fcw_f = (jnp.zeros((H, Op), jnp.float32)
             .at[:, :O].set(params["fc_w"][:, :H].T).astype(compute_dtype))
    fcw_b = (jnp.zeros((H, Op), jnp.float32)
             .at[:, :O].set(params["fc_w"][:, H:2 * H].T).astype(compute_dtype))
    fcb = jnp.zeros((1, Op), jnp.float32).at[0, :O].set(params["fc_b"])

    kernel = functools.partial(
        _bilstm_maxpool_kernel,
        chunk=C, bt=Bt, hidden=H, seq_len=S, seq_pad=S_pad,
        needs_mask=needs_mask, unroll=min(max(unroll, 1), C))

    const = lambda b, i: (0, 0)
    out = pl.pallas_call(
        kernel,
        out_shape=jax.ShapeDtypeStruct((Bp, Op), jnp.float32),
        grid_spec=pltpu.PrefetchScalarGridSpec(
            num_scalar_prefetch=0,
            grid=(n_btiles, n_chunks),
            in_specs=[
                # forward time-chunk of embeds for this batch tile
                pl.BlockSpec((C * Bt, E),
                             lambda b, i: (i * n_btiles + b, 0)),
                # backward time-chunk (same array, chunk n-1-i)
                pl.BlockSpec((C * Bt, E),
                             lambda b, i: ((n_chunks - 1 - i) * n_btiles + b, 0)),
                pl.BlockSpec((E, Gp), const),   # w_ih forward
                pl.BlockSpec((E, Gp), const),   # w_ih backward
                pl.BlockSpec((H, Gp), const),   # w_hh forward
                pl.BlockSpec((H, Gp), const),   # w_hh backward
                pl.BlockSpec((1, Gp), const),   # bias forward (f32)
                pl.BlockSpec((1, Gp), const),   # bias backward (f32)
                pl.BlockSpec((H, Op), const),   # fc weight (forward half)
                pl.BlockSpec((H, Op), const),   # fc weight (backward half)
                pl.BlockSpec((1, Op), const),   # fc bias (f32)
            ],
            out_specs=pl.BlockSpec((Bt, Op), lambda b, i: (b, 0)),
            scratch_shapes=[
                pltpu.VMEM((C * Bt, Gp), jnp.float32),   # fwd gate pre-acts
                pltpu.VMEM((C * Bt, Gp), jnp.float32),   # bwd gate pre-acts
                pltpu.VMEM((Bt, H), jnp.float32),        # h  fwd
                pltpu.VMEM((Bt, H), jnp.float32),        # c  fwd
                pltpu.VMEM((Bt, H), jnp.float32),        # max fwd
                pltpu.VMEM((Bt, H), jnp.float32),        # h  bwd
                pltpu.VMEM((Bt, H), jnp.float32),        # c  bwd
                pltpu.VMEM((Bt, H), jnp.float32),        # max bwd
            ]),
        compiler_params=pltpu.CompilerParams(
            dimension_semantics=("parallel", "arbitrary"),
            vmem_limit_bytes=int(_VMEM_LIMIT)),
    )(x, x, wih_f, wih_b, whh_f, whh_b, b_f, b_b, fcw_f, fcw_b, fcb)

    return {"output": out[:B, :O]}


def reference_forward(text, params):
    # Pure-JAX reference mirroring the PyTorch forward (eval mode).
    x = jnp.take(params["embedding"], text.T, axis=0).astype(jnp.float32)  # (S, B, E)
    H = params["w_hh_f"].shape[1]
    B = text.shape[0]

    def run(wih, whh, b, xs):
        def step(carry, xt):
            h, c = carry
            gates = xt @ wih.T + h @ whh.T + b
            i, f, g, o = jnp.split(gates, 4, axis=-1)
            c = jax.nn.sigmoid(f) * c + jax.nn.sigmoid(i) * jnp.tanh(g)
            h = jax.nn.sigmoid(o) * jnp.tanh(c)
            return (h, c), h
        zeros = jnp.zeros((B, H), jnp.float32)
        _, hs = lax.scan(step, (zeros, zeros), xs)
        return hs

    b_f = params["b_ih_f"] + params["b_hh_f"]
    b_b = params["b_ih_b"] + params["b_hh_b"]
    hs_f = run(params["w_ih_f"], params["w_hh_f"], b_f, x)
    hs_b = run(params["w_ih_b"], params["w_hh_b"], b_b, x[::-1])[::-1]
    out = jnp.concatenate([hs_f, hs_b], axis=-1)   # (S, B, 2H)
    pool = out.max(axis=0)                         # (B, 2H)
    return pool @ params["fc_w"].T + params["fc_b"]


def init_params(key, vocab_size, embed_dim, hidden_dim, output_dim):
    ks = jax.random.split(key, 12)
    bound = 1.0 / (hidden_dim ** 0.5)

    def u(k, shape):
        return jax.random.uniform(k, shape, jnp.float32, -bound, bound)

    return {
        "embedding": jax.random.normal(ks[0], (vocab_size, embed_dim), jnp.float32),
        # forward direction
        "w_ih_f": u(ks[1], (4 * hidden_dim, embed_dim)),
        "w_hh_f": u(ks[2], (4 * hidden_dim, hidden_dim)),
        "b_ih_f": u(ks[3], (4 * hidden_dim,)),
        "b_hh_f": u(ks[4], (4 * hidden_dim,)),
        # backward direction
        "w_ih_b": u(ks[5], (4 * hidden_dim, embed_dim)),
        "w_hh_b": u(ks[6], (4 * hidden_dim, hidden_dim)),
        "b_ih_b": u(ks[7], (4 * hidden_dim,)),
        "b_hh_b": u(ks[8], (4 * hidden_dim,)),
        # classifier
        "fc_w": u(ks[9], (output_dim, 2 * hidden_dim)),
        "fc_b": u(ks[10], (output_dim,)),
    }


if __name__ == "__main__":
    vocab_size, embed_dim, hidden_dim, output_dim = 50, 16, 32, 4
    batch, seq = 2, 8

    key = jax.random.PRNGKey(0)
    k_params, k_text = jax.random.split(key)
    params = init_params(k_params, vocab_size, embed_dim, hidden_dim, output_dim)
    text = jax.random.randint(k_text, (batch, seq), 0, vocab_size, dtype=jnp.int32)

    ref = reference_forward(text, params)

    # 1) f32 path, multi-chunk (S % chunk == 0): state carried across grid steps.
    out = lstm_maxpool_forward(text, params, seq_chunk=4,
                               compute_dtype=jnp.float32)["output"]
    jax.block_until_ready(out)
    assert out.shape == (batch, output_dim)
    assert jnp.allclose(out, ref, atol=1e-4, rtol=1e-4), \
        "Pallas kernel mismatch (f32, even chunks)"

    # 2) f32 path, ragged chunks (S % chunk != 0): edge-chunk masking exercised.
    out2 = lstm_maxpool_forward(text, params, seq_chunk=3,
                                compute_dtype=jnp.float32)["output"]
    jax.block_until_ready(out2)
    assert jnp.allclose(out2, ref, atol=1e-4, rtol=1e-4), \
        "Pallas kernel mismatch (f32, ragged chunks)"

    # 3) default bf16 MXU path with auto VMEM-budgeted chunk size.
    out3 = lstm_maxpool_forward(text, params)["output"]
    jax.block_until_ready(out3)
    assert out3.shape == (batch, output_dim)
    assert jnp.allclose(out3, ref, atol=5e-2, rtol=5e-2), \
        "Pallas kernel mismatch (bf16)"

    print("KERNEL_OK")
</pallas_src>

<mosaic_0001>
module attributes {stable_mosaic.version = 11 : i64} {
  func.func @_bilstm_maxpool_kernel(%arg0: i32, %arg1: i32, %arg2: memref<32x16xf32, #tpu.memory_space<vmem>>, %arg3: memref<32x16xf32, #tpu.memory_space<vmem>>, %arg4: memref<16x128xf32, #tpu.memory_space<vmem>>, %arg5: memref<16x128xf32, #tpu.memory_space<vmem>>, %arg6: memref<32x128xf32, #tpu.memory_space<vmem>>, %arg7: memref<32x128xf32, #tpu.memory_space<vmem>>, %arg8: memref<1x128xf32, #tpu.memory_space<vmem>>, %arg9: memref<1x128xf32, #tpu.memory_space<vmem>>, %arg10: memref<32x128xf32, #tpu.memory_space<vmem>>, %arg11: memref<32x128xf32, #tpu.memory_space<vmem>>, %arg12: memref<1x128xf32, #tpu.memory_space<vmem>>, %arg13: memref<8x128xf32, #tpu.memory_space<vmem>>, %arg14: memref<32x128xf32, #tpu.memory_space<vmem>>, %arg15: memref<32x128xf32, #tpu.memory_space<vmem>>, %arg16: memref<8x32xf32, #tpu.memory_space<vmem>>, %arg17: memref<8x32xf32, #tpu.memory_space<vmem>>, %arg18: memref<8x32xf32, #tpu.memory_space<vmem>>, %arg19: memref<8x32xf32, #tpu.memory_space<vmem>>, %arg20: memref<8x32xf32, #tpu.memory_space<vmem>>, %arg21: memref<8x32xf32, #tpu.memory_space<vmem>>) attributes {dimension_semantics = [#tpu.dimension_semantics<parallel>, #tpu.dimension_semantics<arbitrary>], iteration_bounds = array<i64: 1, 2>, scalar_prefetch = 0 : i64, scratch_operands = 8 : i64, tpu.core_type = #tpu.core_type<tc>, window_params = [{transform_indices = @transform_0, window_bounds = array<i64: 32, 16>}, {transform_indices = @transform_1, window_bounds = array<i64: 32, 16>}, {pipeline_mode = #tpu.pipeline_mode<synchronous>, transform_indices = @transform_2, window_bounds = array<i64: 16, 128>}, {pipeline_mode = #tpu.pipeline_mode<synchronous>, transform_indices = @transform_3, window_bounds = array<i64: 16, 128>}, {pipeline_mode = #tpu.pipeline_mode<synchronous>, transform_indices = @transform_4, window_bounds = array<i64: 32, 128>}, {pipeline_mode = #tpu.pipeline_mode<synchronous>, transform_indices = @transform_5, window_bounds = array<i64: 32, 128>}, {pipeline_mode = #tpu.pipeline_mode<synchronous>, transform_indices = @transform_6, window_bounds = array<i64: 1, 128>}, {pipeline_mode = #tpu.pipeline_mode<synchronous>, transform_indices = @transform_7, window_bounds = array<i64: 1, 128>}, {pipeline_mode = #tpu.pipeline_mode<synchronous>, transform_indices = @transform_8, window_bounds = array<i64: 32, 128>}, {pipeline_mode = #tpu.pipeline_mode<synchronous>, transform_indices = @transform_9, window_bounds = array<i64: 32, 128>}, {pipeline_mode = #tpu.pipeline_mode<synchronous>, transform_indices = @transform_10, window_bounds = array<i64: 1, 128>}, {transform_indices = @transform_11, window_bounds = array<i64: 8, 128>}]} {
    %c0_i32 = arith.constant 0 : i32
    %0 = arith.cmpi eq, %arg1, %c0_i32 : i32
    %1 = arith.extui %0 : i1 to i32
    %c0_i32_0 = arith.constant 0 : i32
    %2 = arith.cmpi ne, %1, %c0_i32_0 : i32
    scf.if %2 {
      %cst_147 = arith.constant 0.000000e+00 : f32
      %342 = vector.broadcast %cst_147 : f32 to vector<8x32xf32>
      %c0_148 = arith.constant 0 : index
      %c0_149 = arith.constant 0 : index
      %343 = vector.load %arg16[%c0_148, %c0_149] : memref<8x32xf32, #tpu.memory_space<vmem>>, vector<8x32xf32>
      tpu.vector_store %arg16[%c0_148, %c0_149], %342 {strides = array<i32>} : memref<8x32xf32, #tpu.memory_space<vmem>>, vector<8x32xf32>,
      %cst_150 = arith.constant 0.000000e+00 : f32
      %344 = vector.broadcast %cst_150 : f32 to vector<8x32xf32>
      %c0_151 = arith.constant 0 : index
      %c0_152 = arith.constant 0 : index
      %345 = vector.load %arg17[%c0_151, %c0_152] : memref<8x32xf32, #tpu.memory_space<vmem>>, vector<8x32xf32>
      tpu.vector_store %arg17[%c0_151, %c0_152], %344 {strides = array<i32>} : memref<8x32xf32, #tpu.memory_space<vmem>>, vector<8x32xf32>,
      %cst_153 = arith.constant 0.000000e+00 : f32
      %346 = vector.broadcast %cst_153 : f32 to vector<8x32xf32>
      %c0_154 = arith.constant 0 : index
      %c0_155 = arith.constant 0 : index
      %347 = vector.load %arg19[%c0_154, %c0_155] : memref<8x32xf32, #tpu.memory_space<vmem>>, vector<8x32xf32>
      tpu.vector_store %arg19[%c0_154, %c0_155], %346 {strides = array<i32>} : memref<8x32xf32, #tpu.memory_space<vmem>>, vector<8x32xf32>,
      %cst_156 = arith.constant 0.000000e+00 : f32
      %348 = vector.broadcast %cst_156 : f32 to vector<8x32xf32>
      %c0_157 = arith.constant 0 : index
      %c0_158 = arith.constant 0 : index
      %349 = vector.load %arg20[%c0_157, %c0_158] : memref<8x32xf32, #tpu.memory_space<vmem>>, vector<8x32xf32>
      tpu.vector_store %arg20[%c0_157, %c0_158], %348 {strides = array<i32>} : memref<8x32xf32, #tpu.memory_space<vmem>>, vector<8x32xf32>,
      %cst_159 = arith.constant -3.40282347E+38 : f32
      %350 = vector.broadcast %cst_159 : f32 to vector<8x32xf32>
      %c0_160 = arith.constant 0 : index
      %c0_161 = arith.constant 0 : index
      %351 = vector.load %arg18[%c0_160, %c0_161] : memref<8x32xf32, #tpu.memory_space<vmem>>, vector<8x32xf32>
      tpu.vector_store %arg18[%c0_160, %c0_161], %350 {strides = array<i32>} : memref<8x32xf32, #tpu.memory_space<vmem>>, vector<8x32xf32>,
      %cst_162 = arith.constant -3.40282347E+38 : f32
      %352 = vector.broadcast %cst_162 : f32 to vector<8x32xf32>
      %c0_163 = arith.constant 0 : index
      %c0_164 = arith.constant 0 : index
      %353 = vector.load %arg21[%c0_163, %c0_164] : memref<8x32xf32, #tpu.memory_space<vmem>>, vector<8x32xf32>
      tpu.vector_store %arg21[%c0_163, %c0_164], %352 {strides = array<i32>} : memref<8x32xf32, #tpu.memory_space<vmem>>, vector<8x32xf32>,
    } else {
    }
    %c0 = arith.constant 0 : index
    %c0_1 = arith.constant 0 : index
    %3 = vector.load %arg2[%c0, %c0_1] : memref<32x16xf32, #tpu.memory_space<vmem>>, vector<32x16xf32>
    %c0_2 = arith.constant 0 : index
    %c0_3 = arith.constant 0 : index
    %4 = vector.load %arg4[%c0_2, %c0_3] : memref<16x128xf32, #tpu.memory_space<vmem>>, vector<16x128xf32>
    %cst = arith.constant dense<0.000000e+00> : vector<32x128xf32>
    %5 = tpu.matmul %3, %4, %cst {dimension_numbers = #tpu.dot_dimension_numbers<[1], [0], [0], [1], [0, 0, 1, 1], [], []>} : vector<32x16xf32>, vector<16x128xf32>, vector<32x128xf32> -> vector<32x128xf32>
    %c0_4 = arith.constant 0 : index
    %c0_5 = arith.constant 0 : index
    %6 = vector.load %arg8[%c0_4, %c0_5] : memref<1x128xf32, #tpu.memory_space<vmem>>, vector<1x128xf32>
    %7 = vector.broadcast %6 : vector<1x128xf32> to vector<32x128xf32>
    %8 = arith.addf %5, %7 : vector<32x128xf32>
    %c0_6 = arith.constant 0 : index
    %c0_7 = arith.constant 0 : index
    %9 = vector.load %arg14[%c0_6, %c0_7] : memref<32x128xf32, #tpu.memory_space<vmem>>, vector<32x128xf32>
    tpu.vector_store %arg14[%c0_6, %c0_7], %8 {strides = array<i32>} : memref<32x128xf32, #tpu.memory_space<vmem>>, vector<32x128xf32>,
    %c0_8 = arith.constant 0 : index
    %c0_9 = arith.constant 0 : index
    %10 = vector.load %arg3[%c0_8, %c0_9] : memref<32x16xf32, #tpu.memory_space<vmem>>, vector<32x16xf32>
    %c0_10 = arith.constant 0 : index
    %c0_11 = arith.constant 0 : index
    %11 = vector.load %arg5[%c0_10, %c0_11] : memref<16x128xf32, #tpu.memory_space<vmem>>, vector<16x128xf32>
    %cst_12 = arith.constant dense<0.000000e+00> : vector<32x128xf32>
    %12 = tpu.matmul %10, %11, %cst_12 {dimension_numbers = #tpu.dot_dimension_numbers<[1], [0], [0], [1], [0, 0, 1, 1], [], []>} : vector<32x16xf32>, vector<16x128xf32>, vector<32x128xf32> -> vector<32x128xf32>
    %c0_13 = arith.constant 0 : index
    %c0_14 = arith.constant 0 : index
    %13 = vector.load %arg9[%c0_13, %c0_14] : memref<1x128xf32, #tpu.memory_space<vmem>>, vector<1x128xf32>
    %14 = vector.broadcast %13 : vector<1x128xf32> to vector<32x128xf32>
    %15 = arith.addf %12, %14 : vector<32x128xf32>
    %c0_15 = arith.constant 0 : index
    %c0_16 = arith.constant 0 : index
    %16 = vector.load %arg15[%c0_15, %c0_16] : memref<32x128xf32, #tpu.memory_space<vmem>>, vector<32x128xf32>
    tpu.vector_store %arg15[%c0_15, %c0_16], %15 {strides = array<i32>} : memref<32x128xf32, #tpu.memory_space<vmem>>, vector<32x128xf32>,
    %c0_17 = arith.constant 0 : index
    %c0_18 = arith.constant 0 : index
    %17 = vector.load %arg6[%c0_17, %c0_18] : memref<32x128xf32, #tpu.memory_space<vmem>>, vector<32x128xf32>
    %c0_19 = arith.constant 0 : index
    %c0_20 = arith.constant 0 : index
    %18 = vector.load %arg7[%c0_19, %c0_20] : memref<32x128xf32, #tpu.memory_space<vmem>>, vector<32x128xf32>
    %c0_21 = arith.constant 0 : index
    %c0_22 = arith.constant 0 : index
    %19 = vector.load %arg16[%c0_21, %c0_22] : memref<8x32xf32, #tpu.memory_space<vmem>>, vector<8x32xf32>
    %c0_23 = arith.constant 0 : index
    %c0_24 = arith.constant 0 : index
    %20 = vector.load %arg17[%c0_23, %c0_24] : memref<8x32xf32, #tpu.memory_space<vmem>>, vector<8x32xf32>
    %c0_25 = arith.constant 0 : index
    %c0_26 = arith.constant 0 : index
    %21 = vector.load %arg18[%c0_25, %c0_26] : memref<8x32xf32, #tpu.memory_space<vmem>>, vector<8x32xf32>
    %c0_27 = arith.constant 0 : index
    %c0_28 = arith.constant 0 : index
    %22 = vector.load %arg19[%c0_27, %c0_28] : memref<8x32xf32, #tpu.memory_space<vmem>>, vector<8x32xf32>
    %c0_29 = arith.constant 0 : index
    %c0_30 = arith.constant 0 : index
    %23 = vector.load %arg20[%c0_29, %c0_30] : memref<8x32xf32, #tpu.memory_space<vmem>>, vector<8x32xf32>
    %c0_31 = arith.constant 0 : index
    %c0_32 = arith.constant 0 : index
    %24 = vector.load %arg21[%c0_31, %c0_32] : memref<8x32xf32, #tpu.memory_space<vmem>>, vector<8x32xf32>
    %c0_i32_33 = arith.constant 0 : i32
    %c8_i32 = arith.constant 8 : i32
    %25 = arith.muli %c0_i32_33, %c8_i32 : i32
    %26 = tpu.assume_multiple %25, 8 : i32
    %c3_i32 = arith.constant 3 : i32
    %27 = arith.subi %c3_i32, %c0_i32_33 : i32
    %c8_i32_34 = arith.constant 8 : i32
    %28 = arith.muli %27, %c8_i32_34 : i32
    %29 = tpu.assume_multiple %28, 8 : i32
    %30 = arith.index_cast %26 : i32 to index
    %c0_35 = arith.constant 0 : index
    %31 = vector.load %arg14[%30, %c0_35] : memref<32x128xf32, #tpu.memory_space<vmem>>, vector<8x128xf32>
    %cst_36 = arith.constant dense<0.000000e+00> : vector<8x128xf32>
    %32 = tpu.matmul %19, %17, %cst_36 {dimension_numbers = #tpu.dot_dimension_numbers<[1], [0], [0], [1], [0, 0, 1, 1], [], []>} : vector<8x32xf32>, vector<32x128xf32>, vector<8x128xf32> -> vector<8x128xf32>
    %33 = arith.addf %31, %32 : vector<8x128xf32>
    %34 = vector.extract_strided_slice %33 {offsets = [0, 0], sizes = [8, 32], strides = [1, 1]} : vector<8x128xf32> to vector<8x32xf32>
    %cst_37 = arith.constant 5.000000e-01 : f32
    %35 = vector.broadcast %cst_37 : f32 to vector<8x32xf32>
    %36 = arith.mulf %35, %34 : vector<8x32xf32>
    %37 = math.tanh %36 : vector<8x32xf32>
    %cst_38 = arith.constant 5.000000e-01 : f32
    %38 = vector.broadcast %cst_38 : f32 to vector<8x32xf32>
    %39 = arith.mulf %38, %37 : vector<8x32xf32>
    %cst_39 = arith.constant 5.000000e-01 : f32
    %40 = vector.broadcast %cst_39 : f32 to vector<8x32xf32>
    %41 = arith.addf %39, %40 : vector<8x32xf32>
    %42 = vector.extract_strided_slice %33 {offsets = [0, 32], sizes = [8, 32], strides = [1, 1]} : vector<8x128xf32> to vector<8x32xf32>
    %cst_40 = arith.constant 5.000000e-01 : f32
    %43 = vector.broadcast %cst_40 : f32 to vector<8x32xf32>
    %44 = arith.mulf %43, %42 : vector<8x32xf32>
    %45 = math.tanh %44 : vector<8x32xf32>
    %cst_41 = arith.constant 5.000000e-01 : f32
    %46 = vector.broadcast %cst_41 : f32 to vector<8x32xf32>
    %47 = arith.mulf %46, %45 : vector<8x32xf32>
    %cst_42 = arith.constant 5.000000e-01 : f32
    %48 = vector.broadcast %cst_42 : f32 to vector<8x32xf32>
    %49 = arith.addf %47, %48 : vector<8x32xf32>
    %50 = vector.extract_strided_slice %33 {offsets = [0, 64], sizes = [8, 32], strides = [1, 1]} : vector<8x128xf32> to vector<8x32xf32>
    %51 = math.tanh %50 : vector<8x32xf32>
    %52 = vector.extract_strided_slice %33 {offsets = [0, 96], sizes = [8, 32], strides = [1, 1]} : vector<8x128xf32> to vector<8x32xf32>
    %cst_43 = arith.constant 5.000000e-01 : f32
    %53 = vector.broadcast %cst_43 : f32 to vector<8x32xf32>
    %54 = arith.mulf %53, %52 : vector<8x32xf32>
    %55 = math.tanh %54 : vector<8x32xf32>
    %cst_44 = arith.constant 5.000000e-01 : f32
    %56 = vector.broadcast %cst_44 : f32 to vector<8x32xf32>
    %57 = arith.mulf %56, %55 : vector<8x32xf32>
    %cst_45 = arith.constant 5.000000e-01 : f32
    %58 = vector.broadcast %cst_45 : f32 to vector<8x32xf32>
    %59 = arith.addf %57, %58 : vector<8x32xf32>
    %60 = arith.mulf %49, %20 : vector<8x32xf32>
    %61 = arith.mulf %41, %51 : vector<8x32xf32>
    %62 = arith.addf %60, %61 : vector<8x32xf32>
    %63 = math.tanh %62 : vector<8x32xf32>
    %64 = arith.mulf %59, %63 : vector<8x32xf32>
    %65 = arith.maximumf %21, %64 : vector<8x32xf32>
    %66 = arith.index_cast %29 : i32 to index
    %c0_46 = arith.constant 0 : index
    %67 = vector.load %arg15[%66, %c0_46] : memref<32x128xf32, #tpu.memory_space<vmem>>, vector<8x128xf32>
    %cst_47 = arith.constant dense<0.000000e+00> : vector<8x128xf32>
    %68 = tpu.matmul %22, %18, %cst_47 {dimension_numbers = #tpu.dot_dimension_numbers<[1], [0], [0], [1], [0, 0, 1, 1], [], []>} : vector<8x32xf32>, vector<32x128xf32>, vector<8x128xf32> -> vector<8x128xf32>
    %69 = arith.addf %67, %68 : vector<8x128xf32>
    %70 = vector.extract_strided_slice %69 {offsets = [0, 0], sizes = [8, 32], strides = [1, 1]} : vector<8x128xf32> to vector<8x32xf32>
    %cst_48 = arith.constant 5.000000e-01 : f32
    %71 = vector.broadcast %cst_48 : f32 to vector<8x32xf32>
    %72 = arith.mulf %71, %70 : vector<8x32xf32>
    %73 = math.tanh %72 : vector<8x32xf32>
    %cst_49 = arith.constant 5.000000e-01 : f32
    %74 = vector.broadcast %cst_49 : f32 to vector<8x32xf32>
    %75 = arith.mulf %74, %73 : vector<8x32xf32>
    %cst_50 = arith.constant 5.000000e-01 : f32
    %76 = vector.broadcast %cst_50 : f32 to vector<8x32xf32>
    %77 = arith.addf %75, %76 : vector<8x32xf32>
    %78 = vector.extract_strided_slice %69 {offsets = [0, 32], sizes = [8, 32], strides = [1, 1]} : vector<8x128xf32> to vector<8x32xf32>
    %cst_51 = arith.constant 5.000000e-01 : f32
    %79 = vector.broadcast %cst_51 : f32 to vector<8x32xf32>
    %80 = arith.mulf %79, %78 : vector<8x32xf32>
    %81 = math.tanh %80 : vector<8x32xf32>
    %cst_52 = arith.constant 5.000000e-01 : f32
    %82 = vector.broadcast %cst_52 : f32 to vector<8x32xf32>
    %83 = arith.mulf %82, %81 : vector<8x32xf32>
    %cst_53 = arith.constant 5.000000e-01 : f32
    %84 = vector.broadcast %cst_53 : f32 to vector<8x32xf32>
    %85 = arith.addf %83, %84 : vector<8x32xf32>
    %86 = vector.extract_strided_slice %69 {offsets = [0, 64], sizes = [8, 32], strides = [1, 1]} : vector<8x128xf32> to vector<8x32xf32>
    %87 = math.tanh %86 : vector<8x32xf32>
    %88 = vector.extract_strided_slice %69 {offsets = [0, 96], sizes = [8, 32], strides = [1, 1]} : vector<8x128xf32> to vector<8x32xf32>
    %cst_54 = arith.constant 5.000000e-01 : f32
    %89 = vector.broadcast %cst_54 : f32 to vector<8x32xf32>
    %90 = arith.mulf %89, %88 : vector<8x32xf32>
    %91 = math.tanh %90 : vector<8x32xf32>
    %cst_55 = arith.constant 5.000000e-01 : f32
    %92 = vector.broadcast %cst_55 : f32 to vector<8x32xf32>
    %93 = arith.mulf %92, %91 : vector<8x32xf32>
    %cst_56 = arith.constant 5.000000e-01 : f32
    %94 = vector.broadcast %cst_56 : f32 to vector<8x32xf32>
    %95 = arith.addf %93, %94 : vector<8x32xf32>
    %96 = arith.mulf %85, %23 : vector<8x32xf32>
    %97 = arith.mulf %77, %87 : vector<8x32xf32>
    %98 = arith.addf %96, %97 : vector<8x32xf32>
    %99 = math.tanh %98 : vector<8x32xf32>
    %100 = arith.mulf %95, %99 : vector<8x32xf32>
    %101 = arith.maximumf %24, %100 : vector<8x32xf32>
    %c1_i32 = arith.constant 1 : i32
    %c8_i32_57 = arith.constant 8 : i32
    %102 = arith.muli %c1_i32, %c8_i32_57 : i32
    %103 = tpu.assume_multiple %102, 8 : i32
    %c3_i32_58 = arith.constant 3 : i32
    %104 = arith.subi %c3_i32_58, %c1_i32 : i32
    %c8_i32_59 = arith.constant 8 : i32
    %105 = arith.muli %104, %c8_i32_59 : i32
    %106 = tpu.assume_multiple %105, 8 : i32
    %107 = arith.index_cast %103 : i32 to index
    %c0_60 = arith.constant 0 : index
    %108 = vector.load %arg14[%107, %c0_60] : memref<32x128xf32, #tpu.memory_space<vmem>>, vector<8x128xf32>
    %cst_61 = arith.constant dense<0.000000e+00> : vector<8x128xf32>
    %109 = tpu.matmul %64, %17, %cst_61 {dimension_numbers = #tpu.dot_dimension_numbers<[1], [0], [0], [1], [0, 0, 1, 1], [], []>} : vector<8x32xf32>, vector<32x128xf32>, vector<8x128xf32> -> vector<8x128xf32>
    %110 = arith.addf %108, %109 : vector<8x128xf32>
    %111 = vector.extract_strided_slice %110 {offsets = [0, 0], sizes = [8, 32], strides = [1, 1]} : vector<8x128xf32> to vector<8x32xf32>
    %cst_62 = arith.constant 5.000000e-01 : f32
    %112 = vector.broadcast %cst_62 : f32 to vector<8x32xf32>
    %113 = arith.mulf %112, %111 : vector<8x32xf32>
    %114 = math.tanh %113 : vector<8x32xf32>
    %cst_63 = arith.constant 5.000000e-01 : f32
    %115 = vector.broadcast %cst_63 : f32 to vector<8x32xf32>
    %116 = arith.mulf %115, %114 : vector<8x32xf32>
    %cst_64 = arith.constant 5.000000e-01 : f32
    %117 = vector.broadcast %cst_64 : f32 to vector<8x32xf32>
    %118 = arith.addf %116, %117 : vector<8x32xf32>
    %119 = vector.extract_strided_slice %110 {offsets = [0, 32], sizes = [8, 32], strides = [1, 1]} : vector<8x128xf32> to vector<8x32xf32>
    %cst_65 = arith.constant 5.000000e-01 : f32
    %120 = vector.broadcast %cst_65 : f32 to vector<8x32xf32>
    %121 = arith.mulf %120, %119 : vector<8x32xf32>
    %122 = math.tanh %121 : vector<8x32xf32>
    %cst_66 = arith.constant 5.000000e-01 : f32
    %123 = vector.broadcast %cst_66 : f32 to vector<8x32xf32>
    %124 = arith.mulf %123, %122 : vector<8x32xf32>
    %cst_67 = arith.constant 5.000000e-01 : f32
    %125 = vector.broadcast %cst_67 : f32 to vector<8x32xf32>
    %126 = arith.addf %124, %125 : vector<8x32xf32>
    %127 = vector.extract_strided_slice %110 {offsets = [0, 64], sizes = [8, 32], strides = [1, 1]} : vector<8x128xf32> to vector<8x32xf32>
    %128 = math.tanh %127 : vector<8x32xf32>
    %129 = vector.extract_strided_slice %110 {offsets = [0, 96], sizes = [8, 32], strides = [1, 1]} : vector<8x128xf32> to vector<8x32xf32>
    %cst_68 = arith.constant 5.000000e-01 : f32
    %130 = vector.broadcast %cst_68 : f32 to vector<8x32xf32>
    %131 = arith.mulf %130, %129 : vector<8x32xf32>
    %132 = math.tanh %131 : vector<8x32xf32>
    %cst_69 = arith.constant 5.000000e-01 : f32
    %133 = vector.broadcast %cst_69 : f32 to vector<8x32xf32>
    %134 = arith.mulf %133, %132 : vector<8x32xf32>
    %cst_70 = arith.constant 5.000000e-01 : f32
    %135 = vector.broadcast %cst_70 : f32 to vector<8x32xf32>
    %136 = arith.addf %134, %135 : vector<8x32xf32>
    %137 = arith.mulf %126, %62 : vector<8x32xf32>
    %138 = arith.mulf %118, %128 : vector<8x32xf32>
    %139 = arith.addf %137, %138 : vector<8x32xf32>
    %140 = math.tanh %139 : vector<8x32xf32>
    %141 = arith.mulf %136, %140 : vector<8x32xf32>
    %142 = arith.maximumf %65, %141 : vector<8x32xf32>
    %143 = arith.index_cast %106 : i32 to index
    %c0_71 = arith.constant 0 : index
    %144 = vector.load %arg15[%143, %c0_71] : memref<32x128xf32, #tpu.memory_space<vmem>>, vector<8x128xf32>
    %cst_72 = arith.constant dense<0.000000e+00> : vector<8x128xf32>
    %145 = tpu.matmul %100, %18, %cst_72 {dimension_numbers = #tpu.dot_dimension_numbers<[1], [0], [0], [1], [0, 0, 1, 1], [], []>} : vector<8x32xf32>, vector<32x128xf32>, vector<8x128xf32> -> vector<8x128xf32>
    %146 = arith.addf %144, %145 : vector<8x128xf32>
    %147 = vector.extract_strided_slice %146 {offsets = [0, 0], sizes = [8, 32], strides = [1, 1]} : vector<8x128xf32> to vector<8x32xf32>
    %cst_73 = arith.constant 5.000000e-01 : f32
    %148 = vector.broadcast %cst_73 : f32 to vector<8x32xf32>
    %149 = arith.mulf %148, %147 : vector<8x32xf32>
    %150 = math.tanh %149 : vector<8x32xf32>
    %cst_74 = arith.constant 5.000000e-01 : f32
    %151 = vector.broadcast %cst_74 : f32 to vector<8x32xf32>
    %152 = arith.mulf %151, %150 : vector<8x32xf32>
    %cst_75 = arith.constant 5.000000e-01 : f32
    %153 = vector.broadcast %cst_75 : f32 to vector<8x32xf32>
    %154 = arith.addf %152, %153 : vector<8x32xf32>
    %155 = vector.extract_strided_slice %146 {offsets = [0, 32], sizes = [8, 32], strides = [1, 1]} : vector<8x128xf32> to vector<8x32xf32>
    %cst_76 = arith.constant 5.000000e-01 : f32
    %156 = vector.broadcast %cst_76 : f32 to vector<8x32xf32>
    %157 = arith.mulf %156, %155 : vector<8x32xf32>
    %158 = math.tanh %157 : vector<8x32xf32>
    %cst_77 = arith.constant 5.000000e-01 : f32
    %159 = vector.broadcast %cst_77 : f32 to vector<8x32xf32>
    %160 = arith.mulf %159, %158 : vector<8x32xf32>
    %cst_78 = arith.constant 5.000000e-01 : f32
    %161 = vector.broadcast %cst_78 : f32 to vector<8x32xf32>
    %162 = arith.addf %160, %161 : vector<8x32xf32>
    %163 = vector.extract_strided_slice %146 {offsets = [0, 64], sizes = [8, 32], strides = [1, 1]} : vector<8x128xf32> to vector<8x32xf32>
    %164 = math.tanh %163 : vector<8x32xf32>
    %165 = vector.extract_strided_slice %146 {offsets = [0, 96], sizes = [8, 32], strides = [1, 1]} : vector<8x128xf32> to vector<8x32xf32>
    %cst_79 = arith.constant 5.000000e-01 : f32
    %166 = vector.broadcast %cst_79 : f32 to vector<8x32xf32>
    %167 = arith.mulf %166, %165 : vector<8x32xf32>
    %168 = math.tanh %167 : vector<8x32xf32>
    %cst_80 = arith.constant 5.000000e-01 : f32
    %169 = vector.broadcast %cst_80 : f32 to vector<8x32xf32>
    %170 = arith.mulf %169, %168 : vector<8x32xf32>
    %cst_81 = arith.constant 5.000000e-01 : f32
    %171 = vector.broadcast %cst_81 : f32 to vector<8x32xf32>
    %172 = arith.addf %170, %171 : vector<8x32xf32>
    %173 = arith.mulf %162, %98 : vector<8x32xf32>
    %174 = arith.mulf %154, %164 : vector<8x32xf32>
    %175 = arith.addf %173, %174 : vector<8x32xf32>
    %176 = math.tanh %175 : vector<8x32xf32>
    %177 = arith.mulf %172, %176 : vector<8x32xf32>
    %178 = arith.maximumf %101, %177 : vector<8x32xf32>
    %c2_i32 = arith.constant 2 : i32
    %c8_i32_82 = arith.constant 8 : i32
    %179 = arith.muli %c2_i32, %c8_i32_82 : i32
    %180 = tpu.assume_multiple %179, 8 : i32
    %c3_i32_83 = arith.constant 3 : i32
    %181 = arith.subi %c3_i32_83, %c2_i32 : i32
    %c8_i32_84 = arith.constant 8 : i32
    %182 = arith.muli %181, %c8_i32_84 : i32
    %183 = tpu.assume_multiple %182, 8 : i32
    %184 = arith.index_cast %180 : i32 to index
    %c0_85 = arith.constant 0 : index
    %185 = vector.load %arg14[%184, %c0_85] : memref<32x128xf32, #tpu.memory_space<vmem>>, vector<8x128xf32>
    %cst_86 = arith.constant dense<0.000000e+00> : vector<8x128xf32>
    %186 = tpu.matmul %141, %17, %cst_86 {dimension_numbers = #tpu.dot_dimension_numbers<[1], [0], [0], [1], [0, 0, 1, 1], [], []>} : vector<8x32xf32>, vector<32x128xf32>, vector<8x128xf32> -> vector<8x128xf32>
    %187 = arith.addf %185, %186 : vector<8x128xf32>
    %188 = vector.extract_strided_slice %187 {offsets = [0, 0], sizes = [8, 32], strides = [1, 1]} : vector<8x128xf32> to vector<8x32xf32>
    %cst_87 = arith.constant 5.000000e-01 : f32
    %189 = vector.broadcast %cst_87 : f32 to vector<8x32xf32>
    %190 = arith.mulf %189, %188 : vector<8x32xf32>
    %191 = math.tanh %190 : vector<8x32xf32>
    %cst_88 = arith.constant 5.000000e-01 : f32
    %192 = vector.broadcast %cst_88 : f32 to vector<8x32xf32>
    %193 = arith.mulf %192, %191 : vector<8x32xf32>
    %cst_89 = arith.constant 5.000000e-01 : f32
    %194 = vector.broadcast %cst_89 : f32 to vector<8x32xf32>
    %195 = arith.addf %193, %194 : vector<8x32xf32>
    %196 = vector.extract_strided_slice %187 {offsets = [0, 32], sizes = [8, 32], strides = [1, 1]} : vector<8x128xf32> to vector<8x32xf32>
    %cst_90 = arith.constant 5.000000e-01 : f32
    %197 = vector.broadcast %cst_90 : f32 to vector<8x32xf32>
    %198 = arith.mulf %197, %196 : vector<8x32xf32>
    %199 = math.tanh %198 : vector<8x32xf32>
    %cst_91 = arith.constant 5.000000e-01 : f32
    %200 = vector.broadcast %cst_91 : f32 to vector<8x32xf32>
    %201 = arith.mulf %200, %199 : vector<8x32xf32>
    %cst_92 = arith.constant 5.000000e-01 : f32
    %202 = vector.broadcast %cst_92 : f32 to vector<8x32xf32>
    %203 = arith.addf %201, %202 : vector<8x32xf32>
    %204 = vector.extract_strided_slice %187 {offsets = [0, 64], sizes = [8, 32], strides = [1, 1]} : vector<8x128xf32> to vector<8x32xf32>
    %205 = math.tanh %204 : vector<8x32xf32>
    %206 = vector.extract_strided_slice %187 {offsets = [0, 96], sizes = [8, 32], strides = [1, 1]} : vector<8x128xf32> to vector<8x32xf32>
    %cst_93 = arith.constant 5.000000e-01 : f32
    %207 = vector.broadcast %cst_93 : f32 to vector<8x32xf32>
    %208 = arith.mulf %207, %206 : vector<8x32xf32>
    %209 = math.tanh %208 : vector<8x32xf32>
    %cst_94 = arith.constant 5.000000e-01 : f32
    %210 = vector.broadcast %cst_94 : f32 to vector<8x32xf32>
    %211 = arith.mulf %210, %209 : vector<8x32xf32>
    %cst_95 = arith.constant 5.000000e-01 : f32
    %212 = vector.broadcast %cst_95 : f32 to vector<8x32xf32>
    %213 = arith.addf %211, %212 : vector<8x32xf32>
    %214 = arith.mulf %203, %139 : vector<8x32xf32>
    %215 = arith.mulf %195, %205 : vector<8x32xf32>
    %216 = arith.addf %214, %215 : vector<8x32xf32>
    %217 = math.tanh %216 : vector<8x32xf32>
    %218 = arith.mulf %213, %217 : vector<8x32xf32>
    %219 = arith.maximumf %142, %218 : vector<8x32xf32>
    %220 = arith.index_cast %183 : i32 to index
    %c0_96 = arith.constant 0 : index
    %221 = vector.load %arg15[%220, %c0_96] : memref<32x128xf32, #tpu.memory_space<vmem>>, vector<8x128xf32>
    %cst_97 = arith.constant dense<0.000000e+00> : vector<8x128xf32>
    %222 = tpu.matmul %177, %18, %cst_97 {dimension_numbers = #tpu.dot_dimension_numbers<[1], [0], [0], [1], [0, 0, 1, 1], [], []>} : vector<8x32xf32>, vector<32x128xf32>, vector<8x128xf32> -> vector<8x128xf32>
    %223 = arith.addf %221, %222 : vector<8x128xf32>
    %224 = vector.extract_strided_slice %223 {offsets = [0, 0], sizes = [8, 32], strides = [1, 1]} : vector<8x128xf32> to vector<8x32xf32>
    %cst_98 = arith.constant 5.000000e-01 : f32
    %225 = vector.broadcast %cst_98 : f32 to vector<8x32xf32>
    %226 = arith.mulf %225, %224 : vector<8x32xf32>
    %227 = math.tanh %226 : vector<8x32xf32>
    %cst_99 = arith.constant 5.000000e-01 : f32
    %228 = vector.broadcast %cst_99 : f32 to vector<8x32xf32>
    %229 = arith.mulf %228, %227 : vector<8x32xf32>
    %cst_100 = arith.constant 5.000000e-01 : f32
    %230 = vector.broadcast %cst_100 : f32 to vector<8x32xf32>
    %231 = arith.addf %229, %230 : vector<8x32xf32>
    %232 = vector.extract_strided_slice %223 {offsets = [0, 32], sizes = [8, 32], strides = [1, 1]} : vector<8x128xf32> to vector<8x32xf32>
    %cst_101 = arith.constant 5.000000e-01 : f32
    %233 = vector.broadcast %cst_101 : f32 to vector<8x32xf32>
    %234 = arith.mulf %233, %232 : vector<8x32xf32>
    %235 = math.tanh %234 : vector<8x32xf32>
    %cst_102 = arith.constant 5.000000e-01 : f32
    %236 = vector.broadcast %cst_102 : f32 to vector<8x32xf32>
    %237 = arith.mulf %236, %235 : vector<8x32xf32>
    %cst_103 = arith.constant 5.000000e-01 : f32
    %238 = vector.broadcast %cst_103 : f32 to vector<8x32xf32>
    %239 = arith.addf %237, %238 : vector<8x32xf32>
    %240 = vector.extract_strided_slice %223 {offsets = [0, 64], sizes = [8, 32], strides = [1, 1]} : vector<8x128xf32> to vector<8x32xf32>
    %241 = math.tanh %240 : vector<8x32xf32>
    %242 = vector.extract_strided_slice %223 {offsets = [0, 96], sizes = [8, 32], strides = [1, 1]} : vector<8x128xf32> to vector<8x32xf32>
    %cst_104 = arith.constant 5.000000e-01 : f32
    %243 = vector.broadcast %cst_104 : f32 to vector<8x32xf32>
    %244 = arith.mulf %243, %242 : vector<8x32xf32>
    %245 = math.tanh %244 : vector<8x32xf32>
    %cst_105 = arith.constant 5.000000e-01 : f32
    %246 = vector.broadcast %cst_105 : f32 to vector<8x32xf32>
    %247 = arith.mulf %246, %245 : vector<8x32xf32>
    %cst_106 = arith.constant 5.000000e-01 : f32
    %248 = vector.broadcast %cst_106 : f32 to vector<8x32xf32>
    %249 = arith.addf %247, %248 : vector<8x32xf32>
    %250 = arith.mulf %239, %175 : vector<8x32xf32>
    %251 = arith.mulf %231, %241 : vector<8x32xf32>
    %252 = arith.addf %250, %251 : vector<8x32xf32>
    %253 = math.tanh %252 : vector<8x32xf32>
    %254 = arith.mulf %249, %253 : vector<8x32xf32>
    %255 = arith.maximumf %178, %254 : vector<8x32xf32>
    %c3_i32_107 = arith.constant 3 : i32
    %c8_i32_108 = arith.constant 8 : i32
    %256 = arith.muli %c3_i32_107, %c8_i32_108 : i32
    %257 = tpu.assume_multiple %256, 8 : i32
    %c3_i32_109 = arith.constant 3 : i32
    %258 = arith.subi %c3_i32_109, %c3_i32_107 : i32
    %c8_i32_110 = arith.constant 8 : i32
    %259 = arith.muli %258, %c8_i32_110 : i32
    %260 = tpu.assume_multiple %259, 8 : i32
    %261 = arith.index_cast %257 : i32 to index
    %c0_111 = arith.constant 0 : index
    %262 = vector.load %arg14[%261, %c0_111] : memref<32x128xf32, #tpu.memory_space<vmem>>, vector<8x128xf32>
    %cst_112 = arith.constant dense<0.000000e+00> : vector<8x128xf32>
    %263 = tpu.matmul %218, %17, %cst_112 {dimension_numbers = #tpu.dot_dimension_numbers<[1], [0], [0], [1], [0, 0, 1, 1], [], []>} : vector<8x32xf32>, vector<32x128xf32>, vector<8x128xf32> -> vector<8x128xf32>
    %264 = arith.addf %262, %263 : vector<8x128xf32>
    %265 = vector.extract_strided_slice %264 {offsets = [0, 0], sizes = [8, 32], strides = [1, 1]} : vector<8x128xf32> to vector<8x32xf32>
    %cst_113 = arith.constant 5.000000e-01 : f32
    %266 = vector.broadcast %cst_113 : f32 to vector<8x32xf32>
    %267 = arith.mulf %266, %265 : vector<8x32xf32>
    %268 = math.tanh %267 : vector<8x32xf32>
    %cst_114 = arith.constant 5.000000e-01 : f32
    %269 = vector.broadcast %cst_114 : f32 to vector<8x32xf32>
    %270 = arith.mulf %269, %268 : vector<8x32xf32>
    %cst_115 = arith.constant 5.000000e-01 : f32
    %271 = vector.broadcast %cst_115 : f32 to vector<8x32xf32>
    %272 = arith.addf %270, %271 : vector<8x32xf32>
    %273 = vector.extract_strided_slice %264 {offsets = [0, 32], sizes = [8, 32], strides = [1, 1]} : vector<8x128xf32> to vector<8x32xf32>
    %cst_116 = arith.constant 5.000000e-01 : f32
    %274 = vector.broadcast %cst_116 : f32 to vector<8x32xf32>
    %275 = arith.mulf %274, %273 : vector<8x32xf32>
    %276 = math.tanh %275 : vector<8x32xf32>
    %cst_117 = arith.constant 5.000000e-01 : f32
    %277 = vector.broadcast %cst_117 : f32 to vector<8x32xf32>
    %278 = arith.mulf %277, %276 : vector<8x32xf32>
    %cst_118 = arith.constant 5.000000e-01 : f32
    %279 = vector.broadcast %cst_118 : f32 to vector<8x32xf32>
    %280 = arith.addf %278, %279 : vector<8x32xf32>
    %281 = vector.extract_strided_slice %264 {offsets = [0, 64], sizes = [8, 32], strides = [1, 1]} : vector<8x128xf32> to vector<8x32xf32>
    %282 = math.tanh %281 : vector<8x32xf32>
    %283 = vector.extract_strided_slice %264 {offsets = [0, 96], sizes = [8, 32], strides = [1, 1]} : vector<8x128xf32> to vector<8x32xf32>
    %cst_119 = arith.constant 5.000000e-01 : f32
    %284 = vector.broadcast %cst_119 : f32 to vector<8x32xf32>
    %285 = arith.mulf %284, %283 : vector<8x32xf32>
    %286 = math.tanh %285 : vector<8x32xf32>
    %cst_120 = arith.constant 5.000000e-01 : f32
    %287 = vector.broadcast %cst_120 : f32 to vector<8x32xf32>
    %288 = arith.mulf %287, %286 : vector<8x32xf32>
    %cst_121 = arith.constant 5.000000e-01 : f32
    %289 = vector.broadcast %cst_121 : f32 to vector<8x32xf32>
    %290 = arith.addf %288, %289 : vector<8x32xf32>
    %291 = arith.mulf %280, %216 : vector<8x32xf32>
    %292 = arith.mulf %272, %282 : vector<8x32xf32>
    %293 = arith.addf %291, %292 : vector<8x32xf32>
    %294 = math.tanh %293 : vector<8x32xf32>
    %295 = arith.mulf %290, %294 : vector<8x32xf32>
    %296 = arith.maximumf %219, %295 : vector<8x32xf32>
    %297 = arith.index_cast %260 : i32 to index
    %c0_122 = arith.constant 0 : index
    %298 = vector.load %arg15[%297, %c0_122] : memref<32x128xf32, #tpu.memory_space<vmem>>, vector<8x128xf32>
    %cst_123 = arith.constant dense<0.000000e+00> : vector<8x128xf32>
    %299 = tpu.matmul %254, %18, %cst_123 {dimension_numbers = #tpu.dot_dimension_numbers<[1], [0], [0], [1], [0, 0, 1, 1], [], []>} : vector<8x32xf32>, vector<32x128xf32>, vector<8x128xf32> -> vector<8x128xf32>
    %300 = arith.addf %298, %299 : vector<8x128xf32>
    %301 = vector.extract_strided_slice %300 {offsets = [0, 0], sizes = [8, 32], strides = [1, 1]} : vector<8x128xf32> to vector<8x32xf32>
    %cst_124 = arith.constant 5.000000e-01 : f32
    %302 = vector.broadcast %cst_124 : f32 to vector<8x32xf32>
    %303 = arith.mulf %302, %301 : vector<8x32xf32>
    %304 = math.tanh %303 : vector<8x32xf32>
    %cst_125 = arith.constant 5.000000e-01 : f32
    %305 = vector.broadcast %cst_125 : f32 to vector<8x32xf32>
    %306 = arith.mulf %305, %304 : vector<8x32xf32>
    %cst_126 = arith.constant 5.000000e-01 : f32
    %307 = vector.broadcast %cst_126 : f32 to vector<8x32xf32>
    %308 = arith.addf %306, %307 : vector<8x32xf32>
    %309 = vector.extract_strided_slice %300 {offsets = [0, 32], sizes = [8, 32], strides = [1, 1]} : vector<8x128xf32> to vector<8x32xf32>
    %cst_127 = arith.constant 5.000000e-01 : f32
    %310 = vector.broadcast %cst_127 : f32 to vector<8x32xf32>
    %311 = arith.mulf %310, %309 : vector<8x32xf32>
    %312 = math.tanh %311 : vector<8x32xf32>
    %cst_128 = arith.constant 5.000000e-01 : f32
    %313 = vector.broadcast %cst_128 : f32 to vector<8x32xf32>
    %314 = arith.mulf %313, %312 : vector<8x32xf32>
    %cst_129 = arith.constant 5.000000e-01 : f32
    %315 = vector.broadcast %cst_129 : f32 to vector<8x32xf32>
    %316 = arith.addf %314, %315 : vector<8x32xf32>
    %317 = vector.extract_strided_slice %300 {offsets = [0, 64], sizes = [8, 32], strides = [1, 1]} : vector<8x128xf32> to vector<8x32xf32>
    %318 = math.tanh %317 : vector<8x32xf32>
    %319 = vector.extract_strided_slice %300 {offsets = [0, 96], sizes = [8, 32], strides = [1, 1]} : vector<8x128xf32> to vector<8x32xf32>
    %cst_130 = arith.constant 5.000000e-01 : f32
    %320 = vector.broadcast %cst_130 : f32 to vector<8x32xf32>
    %321 = arith.mulf %320, %319 : vector<8x32xf32>
    %322 = math.tanh %321 : vector<8x32xf32>
    %cst_131 = arith.constant 5.000000e-01 : f32
    %323 = vector.broadcast %cst_131 : f32 to vector<8x32xf32>
    %324 = arith.mulf %323, %322 : vector<8x32xf32>
    %cst_132 = arith.constant 5.000000e-01 : f32
    %325 = vector.broadcast %cst_132 : f32 to vector<8x32xf32>
    %326 = arith.addf %324, %325 : vector<8x32xf32>
    %327 = arith.mulf %316, %252 : vector<8x32xf32>
    %328 = arith.mulf %308, %318 : vector<8x32xf32>
    %329 = arith.addf %327, %328 : vector<8x32xf32>
    %330 = math.tanh %329 : vector<8x32xf32>
    %331 = arith.mulf %326, %330 : vector<8x32xf32>
    %332 = arith.maximumf %255, %331 : vector<8x32xf32>
    %c4_i32 = arith.constant 4 : i32
    %c0_133 = arith.constant 0 : index
    %c0_134 = arith.constant 0 : index
    %333 = vector.load %arg16[%c0_133, %c0_134] : memref<8x32xf32, #tpu.memory_space<vmem>>, vector<8x32xf32>
    tpu.vector_store %arg16[%c0_133, %c0_134], %295 {strides = array<i32>} : memref<8x32xf32, #tpu.memory_space<vmem>>, vector<8x32xf32>,
    %c0_135 = arith.constant 0 : index
    %c0_136 = arith.constant 0 : index
    %334 = vector.load %arg17[%c0_135, %c0_136] : memref<8x32xf32, #tpu.memory_space<vmem>>, vector<8x32xf32>
    tpu.vector_store %arg17[%c0_135, %c0_136], %293 {strides = array<i32>} : memref<8x32xf32, #tpu.memory_space<vmem>>, vector<8x32xf32>,
    %c0_137 = arith.constant 0 : index
    %c0_138 = arith.constant 0 : index
    %335 = vector.load %arg18[%c0_137, %c0_138] : memref<8x32xf32, #tpu.memory_space<vmem>>, vector<8x32xf32>
    tpu.vector_store %arg18[%c0_137, %c0_138], %296 {strides = array<i32>} : memref<8x32xf32, #tpu.memory_space<vmem>>, vector<8x32xf32>,
    %c0_139 = arith.constant 0 : index
    %c0_140 = arith.constant 0 : index
    %336 = vector.load %arg19[%c0_139, %c0_140] : memref<8x32xf32, #tpu.memory_space<vmem>>, vector<8x32xf32>
    tpu.vector_store %arg19[%c0_139, %c0_140], %331 {strides = array<i32>} : memref<8x32xf32, #tpu.memory_space<vmem>>, vector<8x32xf32>,
    %c0_141 = arith.constant 0 : index
    %c0_142 = arith.constant 0 : index
    %337 = vector.load %arg20[%c0_141, %c0_142] : memref<8x32xf32, #tpu.memory_space<vmem>>, vector<8x32xf32>
    tpu.vector_store %arg20[%c0_141, %c0_142], %329 {strides = array<i32>} : memref<8x32xf32, #tpu.memory_space<vmem>>, vector<8x32xf32>,
    %c0_143 = arith.constant 0 : index
    %c0_144 = arith.constant 0 : index
    %338 = vector.load %arg21[%c0_143, %c0_144] : memref<8x32xf32, #tpu.memory_space<vmem>>, vector<8x32xf32>
    tpu.vector_store %arg21[%c0_143, %c0_144], %332 {strides = array<i32>} : memref<8x32xf32, #tpu.memory_space<vmem>>, vector<8x32xf32>,
    %c1_i32_145 = arith.constant 1 : i32
    %339 = arith.cmpi eq, %arg1, %c1_i32_145 : i32
    %340 = arith.extui %339 : i1 to i32
    %c0_i32_146 = arith.constant 0 : i32
    %341 = arith.cmpi ne, %340, %c0_i32_146 : i32
    scf.if %341 {
      %c0_147 = arith.constant 0 : index
      %c0_148 = arith.constant 0 : index
      %342 = vector.load %arg18[%c0_147, %c0_148] : memref<8x32xf32, #tpu.memory_space<vmem>>, vector<8x32xf32>
      %c0_149 = arith.constant 0 : index
      %c0_150 = arith.constant 0 : index
      %343 = vector.load %arg21[%c0_149, %c0_150] : memref<8x32xf32, #tpu.memory_space<vmem>>, vector<8x32xf32>
      %c0_151 = arith.constant 0 : index
      %c0_152 = arith.constant 0 : index
      %344 = vector.load %arg10[%c0_151, %c0_152] : memref<32x128xf32, #tpu.memory_space<vmem>>, vector<32x128xf32>
      %cst_153 = arith.constant dense<0.000000e+00> : vector<8x128xf32>
      %345 = tpu.matmul %342, %344, %cst_153 {dimension_numbers = #tpu.dot_dimension_numbers<[1], [0], [0], [1], [0, 0, 1, 1], [], []>} : vector<8x32xf32>, vector<32x128xf32>, vector<8x128xf32> -> vector<8x128xf32>
      %c0_154 = arith.constant 0 : index
      %c0_155 = arith.constant 0 : index
      %346 = vector.load %arg11[%c0_154, %c0_155] : memref<32x128xf32, #tpu.memory_space<vmem>>, vector<32x128xf32>
      %cst_156 = arith.constant dense<0.000000e+00> : vector<8x128xf32>
      %347 = tpu.matmul %343, %346, %cst_156 {dimension_numbers = #tpu.dot_dimension_numbers<[1], [0], [0], [1], [0, 0, 1, 1], [], []>} : vector<8x32xf32>, vector<32x128xf32>, vector<8x128xf32> -> vector<8x128xf32>
      %348 = arith.addf %345, %347 : vector<8x128xf32>
      %c0_157 = arith.constant 0 : index
      %c0_158 = arith.constant 0 : index
      %349 = vector.load %arg12[%c0_157, %c0_158] : memref<1x128xf32, #tpu.memory_space<vmem>>, vector<1x128xf32>
      %350 = vector.broadcast %349 : vector<1x128xf32> to vector<8x128xf32>
      %351 = arith.addf %348, %350 : vector<8x128xf32>
      %c0_159 = arith.constant 0 : index
      %c0_160 = arith.constant 0 : index
      %352 = vector.load %arg13[%c0_159, %c0_160] : memref<8x128xf32, #tpu.memory_space<vmem>>, vector<8x128xf32>
      tpu.vector_store %arg13[%c0_159, %c0_160], %351 {strides = array<i32>} : memref<8x128xf32, #tpu.memory_space<vmem>>, vector<8x128xf32>,
    } else {
    }
    return
  }
  func.func @transform_0(%arg0: i32, %arg1: i32) -> (i32, i32) {
    %c1_i32 = arith.constant 1 : i32
    %0 = arith.muli %arg1, %c1_i32 : i32
    %1 = arith.addi %0, %arg0 : i32
    %c0_i32 = arith.constant 0 : i32
    %c0_i32_0 = arith.constant 0 : i32
    return %1, %c0_i32 : i32, i32
  }
  func.func @transform_1(%arg0: i32, %arg1: i32) -> (i32, i32) {
    %c1_i32 = arith.constant 1 : i32
    %0 = arith.subi %c1_i32, %arg1 : i32
    %c1_i32_0 = arith.constant 1 : i32
    %1 = arith.muli %0, %c1_i32_0 : i32
    %2 = arith.addi %1, %arg0 : i32
    %c0_i32 = arith.constant 0 : i32
    %c0_i32_1 = arith.constant 0 : i32
    return %2, %c0_i32 : i32, i32
  }
  func.func @transform_2(%arg0: i32, %arg1: i32) -> (i32, i32) {
    %c0_i32 = arith.constant 0 : i32
    %c0_i32_0 = arith.constant 0 : i32
    %c0_i32_1 = arith.constant 0 : i32
    return %c0_i32, %c0_i32_0 : i32, i32
  }
  func.func @transform_3(%arg0: i32, %arg1: i32) -> (i32, i32) {
    %c0_i32 = arith.constant 0 : i32
    %c0_i32_0 = arith.constant 0 : i32
    %c0_i32_1 = arith.constant 0 : i32
    return %c0_i32, %c0_i32_0 : i32, i32
  }
  func.func @transform_4(%arg0: i32, %arg1: i32) -> (i32, i32) {
    %c0_i32 = arith.constant 0 : i32
    %c0_i32_0 = arith.constant 0 : i32
    %c0_i32_1 = arith.constant 0 : i32
    return %c0_i32, %c0_i32_0 : i32, i32
  }
  func.func @transform_5(%arg0: i32, %arg1: i32) -> (i32, i32) {
    %c0_i32 = arith.constant 0 : i32
    %c0_i32_0 = arith.constant 0 : i32
    %c0_i32_1 = arith.constant 0 : i32
    return %c0_i32, %c0_i32_0 : i32, i32
  }
  func.func @transform_6(%arg0: i32, %arg1: i32) -> (i32, i32) {
    %c0_i32 = arith.constant 0 : i32
    %c0_i32_0 = arith.constant 0 : i32
    %c0_i32_1 = arith.constant 0 : i32
    return %c0_i32, %c0_i32_0 : i32, i32
  }
  func.func @transform_7(%arg0: i32, %arg1: i32) -> (i32, i32) {
    %c0_i32 = arith.constant 0 : i32
    %c0_i32_0 = arith.constant 0 : i32
    %c0_i32_1 = arith.constant 0 : i32
    return %c0_i32, %c0_i32_0 : i32, i32
  }
  func.func @transform_8(%arg0: i32, %arg1: i32) -> (i32, i32) {
    %c0_i32 = arith.constant 0 : i32
    %c0_i32_0 = arith.constant 0 : i32
    %c0_i32_1 = arith.constant 0 : i32
    return %c0_i32, %c0_i32_0 : i32, i32
  }
  func.func @transform_9(%arg0: i32, %arg1: i32) -> (i32, i32) {
    %c0_i32 = arith.constant 0 : i32
    %c0_i32_0 = arith.constant 0 : i32
    %c0_i32_1 = arith.constant 0 : i32
    return %c0_i32, %c0_i32_0 : i32, i32
  }
  func.func @transform_10(%arg0: i32, %arg1: i32) -> (i32, i32) {
    %c0_i32 = arith.constant 0 : i32
    %c0_i32_0 = arith.constant 0 : i32
    %c0_i32_1 = arith.constant 0 : i32
    return %c0_i32, %c0_i32_0 : i32, i32
  }
  func.func @transform_11(%arg0: i32, %arg1: i32) -> (i32, i32) {
    %c0_i32 = arith.constant 0 : i32
    %c0_i32_0 = arith.constant 0 : i32
    return %arg0, %c0_i32 : i32, i32
  }
}

</mosaic_0001>

<llo_original>
// kernel: lstm_maxpool_forward.1
$region0: #{lstm_maxpool_forward.1}
  #allocation0 [shape = 'u32[]', space=smem, size = 0x4, offset = 0x4, fixed_abs, tag = 'smem constant byte address 0x4 - core index']
  #allocation1 [shape = 'u32[144,128]{1,0:T(1,128)}', space=vmem, size = 0x12000, scoped, tag = 'internal scratch']
  #allocation2 [shape = 'f32[32,128]{1,0:T(8,128)}', space=vmem, size = 0x4000, scoped, tag = 'scratch operand']
  #allocation3 [shape = 'f32[32,128]{1,0:T(8,128)}', space=vmem, size = 0x4000, scoped, tag = 'scratch operand']
  #allocation4 [shape = 'f32[8,32]{1,0:T(8,128)}', space=vmem, size = 0x1000, scoped, tag = 'scratch operand']
  #allocation5 [shape = 'f32[8,32]{1,0:T(8,128)}', space=vmem, size = 0x1000, scoped, tag = 'scratch operand']
  #allocation6 [shape = 'f32[8,32]{1,0:T(8,128)}', space=vmem, size = 0x1000, scoped, tag = 'scratch operand']
  #allocation7 [shape = 'f32[8,32]{1,0:T(8,128)}', space=vmem, size = 0x1000, scoped, tag = 'scratch operand']
  #allocation8 [shape = 'f32[8,32]{1,0:T(8,128)}', space=vmem, size = 0x1000, scoped, tag = 'scratch operand']
  #allocation9 [shape = 'f32[8,32]{1,0:T(8,128)}', space=vmem, size = 0x1000, scoped, tag = 'scratch operand']
  %s0 = inlined_call_operand.hbm [shape: f32[64,16], index: 0, kind: input, shape index: {}, may-alias: {0,1}]
  %s1 = inlined_call_operand.hbm [shape: f32[64,16], index: 1, kind: input, shape index: {}, may-alias: {0,1}]
  %s2 = inlined_call_operand.hbm [shape: f32[16,128], index: 2, kind: input, shape index: {}]
  %s3 = inlined_call_operand.hbm [shape: f32[16,128], index: 3, kind: input, shape index: {}]
  %s4 = inlined_call_operand.hbm [shape: f32[32,128], index: 4, kind: input, shape index: {}]
  %s5 = inlined_call_operand.hbm [shape: f32[32,128], index: 5, kind: input, shape index: {}]
  %s6 = inlined_call_operand.hbm [shape: f32[1,128], index: 6, kind: input, shape index: {}]
  %s7 = inlined_call_operand.hbm [shape: f32[1,128], index: 7, kind: input, shape index: {}]
  %s8 = inlined_call_operand.hbm [shape: f32[32,128], index: 8, kind: input, shape index: {}]
  %s9 = inlined_call_operand.hbm [shape: f32[32,128], index: 9, kind: input, shape index: {}]
  %s10 = inlined_call_operand.hbm [shape: f32[1,128], index: 10, kind: input, shape index: {}]
  %s11 = inlined_call_operand.hbm [shape: f32[8,128], index: 11, kind: output, shape index: {}]
  %s12 = sld [smem:[#allocation0]]
  $region129: #{lstm_maxpool_forward.1} parent=0
    _
  %s14 = ssub.s32 1, %s12
  %s15 = scalar_select 0, %s14, %s12
  $region1: #{lstm_maxpool_forward.1} parent=0
    #allocation10 [shape = 'u8[32768]{0}', space=vmem, size = 0x8000, scoped, tag = 'input window, operand 0']
    #allocation11 [shape = 's32[2]{0}', space=sflag, size = 0x8, scoped, tag = 'scoped memory for lstm_maxpool_forward.1']
    #allocation12 [shape = 's32[2]{0}', space=sflag, size = 0x8, scoped, tag = 'scoped memory for lstm_maxpool_forward.1']
    #allocation13 [shape = 'u8[32768]{0}', space=vmem, size = 0x8000, scoped, tag = 'input window, operand 1']
    #allocation14 [shape = 's32[2]{0}', space=sflag, size = 0x8, scoped, tag = 'scoped memory for lstm_maxpool_forward.1']
    #allocation15 [shape = 'u8[8192]{0}', space=vmem, size = 0x2000, scoped, tag = 'input window, operand 2, single buffered']
    #allocation16 [shape = 'u8[8192]{0}', space=vmem, size = 0x2000, scoped, tag = 'input window, operand 3, single buffered']
    #allocation17 [shape = 's32[1]{0}', space=sflag, size = 0x4, scoped, tag = 'scoped memory for lstm_maxpool_forward.1']
    #allocation18 [shape = 'u8[16384]{0}', space=vmem, size = 0x4000, scoped, tag = 'input window, operand 4, single buffered']
    #allocation19 [shape = 'u8[16384]{0}', space=vmem, size = 0x4000, scoped, tag = 'input window, operand 5, single buffered']
    #allocation20 [shape = 's32[1]{0}', space=sflag, size = 0x4, scoped, tag = 'scoped memory for lstm_maxpool_forward.1']
    #allocation21 [shape = 'u8[512]{0}', space=vmem, size = 0x400, scoped, tag = 'input window, operand 6, single buffered']
    #allocation22 [shape = 'u8[512]{0}', space=vmem, size = 0x400, scoped, tag = 'input window, operand 7, single buffered']
    #allocation23 [shape = 's32[1]{0}', space=sflag, size = 0x4, scoped, tag = 'scoped memory for lstm_maxpool_forward.1']
    #allocation24 [shape = 'u8[16384]{0}', space=vmem, size = 0x4000, scoped, tag = 'input window, operand 8, single buffered']
    #allocation25 [shape = 'u8[16384]{0}', space=vmem, size = 0x4000, scoped, tag = 'input window, operand 9, single buffered']
    #allocation26 [shape = 's32[1]{0}', space=sflag, size = 0x4, scoped, tag = 'scoped memory for lstm_maxpool_forward.1']
    #allocation27 [shape = 'u8[512]{0}', space=vmem, size = 0x400, scoped, tag = 'input window, operand 10, single buffered']
    #allocation28 [shape = 'u8[4096]{0}', space=vmem, size = 0x1000, scoped, tag = 'output window, operand 0, single buffered']
    %16 = vsyncpa [#allocation11], 0
    %s17 = scalar_lea.sflag [#allocation11], 1
    %18 = vsyncpa %s17, 0
    %19 = vsyncpa [#allocation14], 0
    %s20 = scalar_lea.sflag [#allocation14], 1
    %21 = vsyncpa %s20, 0
    %22 = vsyncpa [#allocation17], 0
    %23 = vsyncpa [#allocation20], 0
    %24 = vsyncpa [#allocation23], 0
    %25 = vsyncpa [#allocation26], 0
    %26 = vsyncpa [#allocation12], 0
    loop: start=0, step=1, limit=4
    $region2: #{lstm_maxpool_forward.1} parent=1 // loop_pre_header
      _
    $region3: #{lstm_maxpool_forward.1} parent=1 // loop_header
      %s28 = sphi 0, %s32
      %p29 = scmp.ge.s32.totalorder %s28, 4
      %s35 = sphi 0, %s47
      %s36 = sphi 0, %s43
      %s37 = sphi 0, %s35
      %s38 = sphi 0, %s36
      %s39 = sphi 0, %s37
      %s40 = sphi 0, %s38
      %s52 = sphi 0, %s54
      %s55 = sphi 0, %s52
      %s56 = sphi 0, %s55
      %s72 = sphi 0, %s56
      %s82 = sphi 0, %s84
      %s85 = sphi 0, %s82
      %s86 = sphi 0, %s85
      %s102 = sphi 0, %s86
      %s106 = sphi 0, %s106
      %s108 = sphi 0, %s106
      %s109 = sphi 0, %s108
      %s123 = sphi 0, %s109
      %s127 = sphi 0, %s127
      %s129 = sphi 0, %s127
      %s130 = sphi 0, %s129
      %s144 = sphi 0, %s130
      %s148 = sphi 0, %s148
      %s150 = sphi 0, %s148
      %s151 = sphi 0, %s150
      %s165 = sphi 0, %s151
      %s169 = sphi 0, %s169
      %s171 = sphi 0, %s169
      %s172 = sphi 0, %s171
      %s186 = sphi 0, %s172
      %s190 = sphi 0, %s190
      %s192 = sphi 0, %s190
      %s193 = sphi 0, %s192
      %s207 = sphi 0, %s193
      %s211 = sphi 0, %s211
      %s213 = sphi 0, %s211
      %s214 = sphi 0, %s213
      %s228 = sphi 0, %s214
      %s232 = sphi 0, %s232
      %s234 = sphi 0, %s232
      %s235 = sphi 0, %s234
      %s249 = sphi 0, %s235
      %s253 = sphi 0, %s253
      %s255 = sphi 0, %s253
      %s256 = sphi 0, %s255
      %s270 = sphi 0, %s256
      %s274 = sphi 0, %s274
      %s276 = sphi 0, %s274
      %s277 = sphi 0, %s276
      %s291 = sphi 0, %s277
      %s297 = sphi 0, %s299
      %s300 = sphi 0, %s297
      %s301 = sphi 0, %s300
      %s317 = sphi 0, %s301
    $region4: #{lstm_maxpool_forward.1} parent=1 // loop_header_branch
      %31 = sbr.rel (%p29) target = $region8
    $region5: #{lstm_maxpool_forward.1} parent=1 // loop_body
      %s33 = ssub.s32 %s28, 1
      %s34 = ssub.s32 %s28, 2
      %s41 = sadd.s32 1, %s36
      %p42 = scmp.ge.s32.totalorder %s41, 2
      %s43 = scalar_select %p42, 0, %s41
      %s44 = sadd.s32 1, %s35
      %s45 = scalar_select %p42, %s44, %s35
      %p46 = scmp.ge.s32.totalorder %s45, 1
      %s47 = scalar_select %p46, 0, %s45
      %s48 = sadd.s32 %s36, %s35
      %s49 = sadd.s32 %s43, %s47
      %s50 = ssub.s32 %s48, %s49
      %p51 = scmp.eq.s32.totalorder %s50, 0
      %s53 = sadd.s32 %s52, 1
      %s54 = scalar_select %p51, %s52, %s53
      %p57 = pneg %p51
      %p58 = scmp.eq.s32.totalorder %s28, 1
      %p59 = por %p57, %p58
      %p60 = scmp.ne.s32.totalorder %s52, %s55
      %p61 = scmp.eq.s32.totalorder %s28, 0
      %p62 = por %p60, %p61
      %p63 = scmp.ne.s32.totalorder %s52, %s55
      %p64 = scmp.eq.s32.totalorder %s33, 1
      %p65 = por %p63, %p64
      %p66 = scmp.ne.s32.totalorder %s55, %s56
      %p67 = scmp.eq.s32.totalorder %s33, 0
      %p68 = por %p66, %p67
      %p69 = scmp.ne.s32.totalorder %s55, %s56
      %p70 = scmp.eq.s32.totalorder %s34, 1
      %p71 = por %p69, %p70
      %p73 = scmp.ne.s32.totalorder %s56, %s72
      %p74 = scmp.eq.s32.totalorder %s34, 0
      %p75 = por %p73, %p74
      %s76 = ssub.s32 1, %s36
      %s77 = sadd.s32 %s76, %s35
      %s78 = ssub.s32 1, %s43
      %s79 = sadd.s32 %s78, %s47
      %s80 = ssub.s32 %s77, %s79
      %p81 = scmp.eq.s32.totalorder %s80, 0
      %s83 = sadd.s32 %s82, 1
      %s84 = scalar_select %p81, %s82, %s83
      %p87 = pneg %p81
      %p88 = scmp.eq.s32.totalorder %s28, 1
      %p89 = por %p87, %p88
      %p90 = scmp.ne.s32.totalorder %s82, %s85
      %p91 = scmp.eq.s32.totalorder %s28, 0
      %p92 = por %p90, %p91
      %p93 = scmp.ne.s32.totalorder %s82, %s85
      %p94 = scmp.eq.s32.totalorder %s33, 1
      %p95 = por %p93, %p94
      %p96 = scmp.ne.s32.totalorder %s85, %s86
      %p97 = scmp.eq.s32.totalorder %s33, 0
      %p98 = por %p96, %p97
      %p99 = scmp.ne.s32.totalorder %s85, %s86
      %p100 = scmp.eq.s32.totalorder %s34, 1
      %p101 = por %p99, %p100
      %p103 = scmp.ne.s32.totalorder %s86, %s102
      %p104 = scmp.eq.s32.totalorder %s34, 0
      %p105 = por %p103, %p104
      %s107 = sadd.s32 %s106, 1
      %p110 = scmp.eq.s32.totalorder %s28, 1
      %p111 = scmp.ne.s32.totalorder %s106, %s108
      %p112 = scmp.eq.s32.totalorder %s28, 0
      %p113 = por %p111, %p112
      %p114 = scmp.ne.s32.totalorder %s106, %s108
      %p115 = scmp.eq.s32.totalorder %s33, 1
      %p116 = por %p114, %p115
      %p117 = scmp.ne.s32.totalorder %s108, %s109
      %p118 = scmp.eq.s32.totalorder %s33, 0
      %p119 = por %p117, %p118
      %p120 = scmp.ne.s32.totalorder %s108, %s109
      %p121 = scmp.eq.s32.totalorder %s34, 1
      %p122 = por %p120, %p121
      %p124 = scmp.ne.s32.totalorder %s109, %s123
      %p125 = scmp.eq.s32.totalorder %s34, 0
      %p126 = por %p124, %p125
      %s128 = sadd.s32 %s127, 1
      %p131 = scmp.eq.s32.totalorder %s28, 1
      %p132 = scmp.ne.s32.totalorder %s127, %s129
      %p133 = scmp.eq.s32.totalorder %s28, 0
      %p134 = por %p132, %p133
      %p135 = scmp.ne.s32.totalorder %s127, %s129
      %p136 = scmp.eq.s32.totalorder %s33, 1
      %p137 = por %p135, %p136
      %p138 = scmp.ne.s32.totalorder %s129, %s130
      %p139 = scmp.eq.s32.totalorder %s33, 0
      %p140 = por %p138, %p139
      %p141 = scmp.ne.s32.totalorder %s129, %s130
      %p142 = scmp.eq.s32.totalorder %s34, 1
      %p143 = por %p141, %p142
      %p145 = scmp.ne.s32.totalorder %s130, %s144
      %p146 = scmp.eq.s32.totalorder %s34, 0
      %p147 = por %p145, %p146
      %s149 = sadd.s32 %s148, 1
      %p152 = scmp.eq.s32.totalorder %s28, 1
      %p153 = scmp.ne.s32.totalorder %s148, %s150
      %p154 = scmp.eq.s32.totalorder %s28, 0
      %p155 = por %p153, %p154
      %p156 = scmp.ne.s32.totalorder %s148, %s150
      %p157 = scmp.eq.s32.totalorder %s33, 1
      %p158 = por %p156, %p157
      %p159 = scmp.ne.s32.totalorder %s150, %s151
      %p160 = scmp.eq.s32.totalorder %s33, 0
      %p161 = por %p159, %p160
      %p162 = scmp.ne.s32.totalorder %s150, %s151
      %p163 = scmp.eq.s32.totalorder %s34, 1
      %p164 = por %p162, %p163
      %p166 = scmp.ne.s32.totalorder %s151, %s165
      %p167 = scmp.eq.s32.totalorder %s34, 0
      %p168 = por %p166, %p167
      %s170 = sadd.s32 %s169, 1
      %p173 = scmp.eq.s32.totalorder %s28, 1
      %p174 = scmp.ne.s32.totalorder %s169, %s171
      %p175 = scmp.eq.s32.totalorder %s28, 0
      %p176 = por %p174, %p175
      %p177 = scmp.ne.s32.totalorder %s169, %s171
      %p178 = scmp.eq.s32.totalorder %s33, 1
      %p179 = por %p177, %p178
      %p180 = scmp.ne.s32.totalorder %s171, %s172
      %p181 = scmp.eq.s32.totalorder %s33, 0
      %p182 = por %p180, %p181
      %p183 = scmp.ne.s32.totalorder %s171, %s172
      %p184 = scmp.eq.s32.totalorder %s34, 1
      %p185 = por %p183, %p184
      %p187 = scmp.ne.s32.totalorder %s172, %s186
      %p188 = scmp.eq.s32.totalorder %s34, 0
      %p189 = por %p187, %p188
      %s191 = sadd.s32 %s190, 1
      %p194 = scmp.eq.s32.totalorder %s28, 1
      %p195 = scmp.ne.s32.totalorder %s190, %s192
      %p196 = scmp.eq.s32.totalorder %s28, 0
      %p197 = por %p195, %p196
      %p198 = scmp.ne.s32.totalorder %s190, %s192
      %p199 = scmp.eq.s32.totalorder %s33, 1
      %p200 = por %p198, %p199
      %p201 = scmp.ne.s32.totalorder %s192, %s193
      %p202 = scmp.eq.s32.totalorder %s33, 0
      %p203 = por %p201, %p202
      %p204 = scmp.ne.s32.totalorder %s192, %s193
      %p205 = scmp.eq.s32.totalorder %s34, 1
      %p206 = por %p204, %p205
      %p208 = scmp.ne.s32.totalorder %s193, %s207
      %p209 = scmp.eq.s32.totalorder %s34, 0
      %p210 = por %p208, %p209
      %s212 = sadd.s32 %s211, 1
      %p215 = scmp.eq.s32.totalorder %s28, 1
      %p216 = scmp.ne.s32.totalorder %s211, %s213
      %p217 = scmp.eq.s32.totalorder %s28, 0
      %p218 = por %p216, %p217
      %p219 = scmp.ne.s32.totalorder %s211, %s213
      %p220 = scmp.eq.s32.totalorder %s33, 1
      %p221 = por %p219, %p220
      %p222 = scmp.ne.s32.totalorder %s213, %s214
      %p223 = scmp.eq.s32.totalorder %s33, 0
      %p224 = por %p222, %p223
      %p225 = scmp.ne.s32.totalorder %s213, %s214
      %p226 = scmp.eq.s32.totalorder %s34, 1
      %p227 = por %p225, %p226
      %p229 = scmp.ne.s32.totalorder %s214, %s228
      %p230 = scmp.eq.s32.totalorder %s34, 0
      %p231 = por %p229, %p230
      %s233 = sadd.s32 %s232, 1
      %p236 = scmp.eq.s32.totalorder %s28, 1
      %p237 = scmp.ne.s32.totalorder %s232, %s234
      %p238 = scmp.eq.s32.totalorder %s28, 0
      %p239 = por %p237, %p238
      %p240 = scmp.ne.s32.totalorder %s232, %s234
      %p241 = scmp.eq.s32.totalorder %s33, 1
      %p242 = por %p240, %p241
      %p243 = scmp.ne.s32.totalorder %s234, %s235
      %p244 = scmp.eq.s32.totalorder %s33, 0
      %p245 = por %p243, %p244
      %p246 = scmp.ne.s32.totalorder %s234, %s235
      %p247 = scmp.eq.s32.totalorder %s34, 1
      %p248 = por %p246, %p247
      %p250 = scmp.ne.s32.totalorder %s235, %s249
      %p251 = scmp.eq.s32.totalorder %s34, 0
      %p252 = por %p250, %p251
      %s254 = sadd.s32 %s253, 1
      %p257 = scmp.eq.s32.totalorder %s28, 1
      %p258 = scmp.ne.s32.totalorder %s253, %s255
      %p259 = scmp.eq.s32.totalorder %s28, 0
      %p260 = por %p258, %p259
      %p261 = scmp.ne.s32.totalorder %s253, %s255
      %p262 = scmp.eq.s32.totalorder %s33, 1
      %p263 = por %p261, %p262
      %p264 = scmp.ne.s32.totalorder %s255, %s256
      %p265 = scmp.eq.s32.totalorder %s33, 0
      %p266 = por %p264, %p265
      %p267 = scmp.ne.s32.totalorder %s255, %s256
      %p268 = scmp.eq.s32.totalorder %s34, 1
      %p269 = por %p267, %p268
      %p271 = scmp.ne.s32.totalorder %s256, %s270
      %p272 = scmp.eq.s32.totalorder %s34, 0
      %p273 = por %p271, %p272
      %s275 = sadd.s32 %s274, 1
      %p278 = scmp.eq.s32.totalorder %s28, 1
      %p279 = scmp.ne.s32.totalorder %s274, %s276
      %p280 = scmp.eq.s32.totalorder %s28, 0
      %p281 = por %p279, %p280
      %p282 = scmp.ne.s32.totalorder %s274, %s276
      %p283 = scmp.eq.s32.totalorder %s33, 1
      %p284 = por %p282, %p283
      %p285 = scmp.ne.s32.totalorder %s276, %s277
      %p286 = scmp.eq.s32.totalorder %s33, 0
      %p287 = por %p285, %p286
      %p288 = scmp.ne.s32.totalorder %s276, %s277
      %p289 = scmp.eq.s32.totalorder %s34, 1
      %p290 = por %p288, %p289
      %p292 = scmp.ne.s32.totalorder %s277, %s291
      %p293 = scmp.eq.s32.totalorder %s34, 0
      %p294 = por %p292, %p293
      %s295 = ssub.s32 %s35, %s47
      %p296 = scmp.eq.s32.totalorder %s295, 0
      %s298 = sadd.s32 %s297, 1
      %s299 = scalar_select %p296, %s297, %s298
      %p302 = pneg %p296
      %p303 = scmp.eq.s32.totalorder %s28, 1
      %p304 = por %p302, %p303
      %p305 = scmp.ne.s32.totalorder %s297, %s300
      %p306 = scmp.eq.s32.totalorder %s28, 0
      %p307 = por %p305, %p306
      %p308 = scmp.ne.s32.totalorder %s297, %s300
      %p309 = scmp.eq.s32.totalorder %s33, 1
      %p310 = por %p308, %p309
      %p311 = scmp.ne.s32.totalorder %s300, %s301
      %p312 = scmp.eq.s32.totalorder %s33, 0
      %p313 = por %p311, %p312
      %p314 = scmp.ne.s32.totalorder %s300, %s301
      %p315 = scmp.eq.s32.totalorder %s34, 1
      %p316 = por %p314, %p315
      %p318 = scmp.ne.s32.totalorder %s301, %s317
      %p319 = scmp.eq.s32.totalorder %s34, 0
      %p320 = por %p318, %p319
      %p321 = scmp.le.s32.totalorder 1, %s28
      %p322 = scmp.lt.s32.totalorder %s28, 3
      %p323 = pnand %p321, %p322
      %p324 = pneg %p323
      // Predicated region
      $region9: #{lstm_maxpool_forward.1} parent=5 // pred_check
        _
      $region10: #{lstm_maxpool_forward.1} parent=5 // pred_check_branch
        %326 = sbr.rel (%p323) target = $region12
      $region11: #{lstm_maxpool_forward.1} parent=5 // pred_region
        %s327 = ssub.s32 %s28, 1
        // Predicated region
        $region13: #{lstm_maxpool_forward.1} parent=11 // pred_check
          %p328 = pneg %p119
        $region14: #{lstm_maxpool_forward.1} parent=11 // pred_check_branch
          %330 = sbr.rel (%p328) target = $region16
        $region15: #{lstm_maxpool_forward.1} parent=11 // pred_region
          %s332 = ssub.s32 256, 256
          %333 = vsyncadd [#allocation14], %s332
          %s334 = sshll.u32 [#allocation15], 4
          %s335 = int_to_ptr.vmem [resolvable:$true] %s334
          %340 = dma.hbm_to_vmem [thread:$0]  %s2, 256, %s335, [#allocation14], 128, 128, 8
        $region16: #{lstm_maxpool_forward.1} parent=11 // pred_fallthru
          _
        // Predicated region
        $region17: #{lstm_maxpool_forward.1} parent=11 // pred_check
          %p341 = pneg %p140
        $region18: #{lstm_maxpool_forward.1} parent=11 // pred_check_branch
          %343 = sbr.rel (%p341) target = $region20
        $region19: #{lstm_maxpool_forward.1} parent=11 // pred_region
          %s345 = ssub.s32 256, 256
          %346 = vsyncadd [#allocation17], %s345
          %s347 = sshll.u32 [#allocation16], 4
          %s348 = int_to_ptr.vmem [resolvable:$true] %s347
          %353 = dma.hbm_to_vmem [thread:$0]  %s3, 256, %s348, [#allocation17], 128, 128, 8
        $region20: #{lstm_maxpool_forward.1} parent=11 // pred_fallthru
          _
        // Predicated region
        $region21: #{lstm_maxpool_forward.1} parent=11 // pred_check
          %p354 = pneg %p161
        $region22: #{lstm_maxpool_forward.1} parent=11 // pred_check_branch
          %356 = sbr.rel (%p354) target = $region24
        $region23: #{lstm_maxpool_forward.1} parent=11 // pred_region
          %s358 = ssub.s32 512, 512
          %359 = vsyncadd [#allocation17], %s358
          %s360 = sshll.u32 [#allocation18], 4
          %s361 = int_to_ptr.vmem [resolvable:$true] %s360
          %366 = dma.hbm_to_vmem [thread:$0]  %s4, 512, %s361, [#allocation17], 128, 128, 8
        $region24: #{lstm_maxpool_forward.1} parent=11 // pred_fallthru
          _
        // Predicated region
        $region25: #{lstm_maxpool_forward.1} parent=11 // pred_check
          %p367 = pneg %p182
        $region26: #{lstm_maxpool_forward.1} parent=11 // pred_check_branch
          %369 = sbr.rel (%p367) target = $region28
        $region27: #{lstm_maxpool_forward.1} parent=11 // pred_region
          %s371 = ssub.s32 512, 512
          %372 = vsyncadd [#allocation20], %s371
          %s373 = sshll.u32 [#allocation19], 4
          %s374 = int_to_ptr.vmem [resolvable:$true] %s373
          %379 = dma.hbm_to_vmem [thread:$0]  %s5, 512, %s374, [#allocation20], 128, 128, 8
        $region28: #{lstm_maxpool_forward.1} parent=11 // pred_fallthru
          _
        // Predicated region
        $region29: #{lstm_maxpool_forward.1} parent=11 // pred_check
          %p380 = pneg %p203
        $region30: #{lstm_maxpool_forward.1} parent=11 // pred_check_branch
          %382 = sbr.rel (%p380) target = $region32
        $region31: #{lstm_maxpool_forward.1} parent=11 // pred_region
          %s384 = ssub.s32 16, 16
          %385 = vsyncadd [#allocation20], %s384
          %s387 = sshll.u32 [#allocation21], 4
          %s388 = int_to_ptr.vmem [resolvable:$true] %s387
          %390 = dma.hbm_to_vmem [thread:$0]  %s6, 16, %s388, [#allocation20]
        $region32: #{lstm_maxpool_forward.1} parent=11 // pred_fallthru
          _
        // Predicated region
        $region33: #{lstm_maxpool_forward.1} parent=11 // pred_check
          %p391 = pneg %p224
        $region34: #{lstm_maxpool_forward.1} parent=11 // pred_check_branch
          %393 = sbr.rel (%p391) target = $region36
        $region35: #{lstm_maxpool_forward.1} parent=11 // pred_region
          %s395 = ssub.s32 16, 16
          %396 = vsyncadd [#allocation23], %s395
          %s398 = sshll.u32 [#allocation22], 4
          %s399 = int_to_ptr.vmem [resolvable:$true] %s398
          %401 = dma.hbm_to_vmem [thread:$0]  %s7, 16, %s399, [#allocation23]
        $region36: #{lstm_maxpool_forward.1} parent=11 // pred_fallthru
          _
        // Predicated region
        $region37: #{lstm_maxpool_forward.1} parent=11 // pred_check
          %p402 = pneg %p245
        $region38: #{lstm_maxpool_forward.1} parent=11 // pred_check_branch
          %404 = sbr.rel (%p402) target = $region40
        $region39: #{lstm_maxpool_forward.1} parent=11 // pred_region
          %s406 = ssub.s32 512, 512
          %407 = vsyncadd [#allocation23], %s406
          %s408 = sshll.u32 [#allocation24], 4
          %s409 = int_to_ptr.vmem [resolvable:$true] %s408
          %414 = dma.hbm_to_vmem [thread:$0]  %s8, 512, %s409, [#allocation23], 128, 128, 8
        $region40: #{lstm_maxpool_forward.1} parent=11 // pred_fallthru
          _
        // Predicated region
        $region41: #{lstm_maxpool_forward.1} parent=11 // pred_check
          %p415 = pneg %p266
        $region42: #{lstm_maxpool_forward.1} parent=11 // pred_check_branch
          %417 = sbr.rel (%p415) target = $region44
        $region43: #{lstm_maxpool_forward.1} parent=11 // pred_region
          %s419 = ssub.s32 512, 512
          %420 = vsyncadd [#allocation26], %s419
          %s421 = sshll.u32 [#allocation25], 4
          %s422 = int_to_ptr.vmem [resolvable:$true] %s421
          %427 = dma.hbm_to_vmem [thread:$0]  %s9, 512, %s422, [#allocation26], 128, 128, 8
        $region44: #{lstm_maxpool_forward.1} parent=11 // pred_fallthru
          _
        // Predicated region
        $region45: #{lstm_maxpool_forward.1} parent=11 // pred_check
          %p428 = pneg %p287
        $region46: #{lstm_maxpool_forward.1} parent=11 // pred_check_branch
          %430 = sbr.rel (%p428) target = $region48
        $region47: #{lstm_maxpool_forward.1} parent=11 // pred_region
          %s432 = ssub.s32 16, 16
          %433 = vsyncadd [#allocation26], %s432
          %s435 = sshll.u32 [#allocation27], 4
          %s436 = int_to_ptr.vmem [resolvable:$true] %s435
          %438 = dma.hbm_to_vmem [thread:$0]  %s10, 16, %s436, [#allocation26]
        $region48: #{lstm_maxpool_forward.1} parent=11 // pred_fallthru
          _
      $region12: #{lstm_maxpool_forward.1} parent=5 // pred_fallthru
        _
      %p439 = scmp.lt.s32.totalorder %s28, 2
      // Predicated region
      $region49: #{lstm_maxpool_forward.1} parent=5 // pred_check
        %p440 = pneg %p439
      $region50: #{lstm_maxpool_forward.1} parent=5 // pred_check_branch
        %442 = sbr.rel (%p440) target = $region52
      $region51: #{lstm_maxpool_forward.1} parent=5 // pred_region
        // Predicated region
        $region53: #{lstm_maxpool_forward.1} parent=51 // pred_check
          %p443 = pneg %p62
        $region54: #{lstm_maxpool_forward.1} parent=51 // pred_check_branch
          %445 = sbr.rel (%p443) target = $region56
        $region55: #{lstm_maxpool_forward.1} parent=51 // pred_region
          %s446 = sand.u32 %s52, 1
          %s447 = scalar_lea.sflag [#allocation11], %s446
          %s448 = sand.u32 %s52, 1
          %s449 = smul.addr %s448, 32
          %s450 = scalar_lea.vmem [#allocation10], %s449
          %s451 = sadd.s32 %s36, %s35
          %s452 = smul.u32 4, %s451
          %s454 = ssub.s32 512, 512
          %455 = vsyncadd %s447, %s454
          %s456 = smul.addr %s452, 128
          %s457 = scalar_lea.hbm %s0, %s456
          %s458 = sshll.u32 %s450, 4
          %s459 = int_to_ptr.vmem [resolvable:$true] %s458
          %464 = dma.hbm_to_vmem [thread:$0]  %s457, 512, %s459, %s447, 128, 128, 8
        $region56: #{lstm_maxpool_forward.1} parent=51 // pred_fallthru
          _
        // Predicated region
        $region57: #{lstm_maxpool_forward.1} parent=51 // pred_check
          %p465 = pneg %p92
        $region58: #{lstm_maxpool_forward.1} parent=51 // pred_check_branch
          %467 = sbr.rel (%p465) target = $region60
        $region59: #{lstm_maxpool_forward.1} parent=51 // pred_region
          %s468 = sand.u32 %s28, 1
          %s469 = scalar_lea.sflag [#allocation14], %s468
          %s470 = sand.u32 %s82, 1
          %s471 = smul.addr %s470, 32
          %s472 = scalar_lea.vmem [#allocation13], %s471
          %s473 = ssub.s32 1, %s36
          %s474 = sadd.s32 %s473, %s35
          %s475 = smul.u32 4, %s474
          %s477 = ssub.s32 512, 512
          %478 = vsyncadd %s469, %s477
          %s479 = smul.addr %s475, 128
          %s480 = scalar_lea.hbm %s1, %s479
          %s481 = sshll.u32 %s472, 4
          %s482 = int_to_ptr.vmem [resolvable:$true] %s481
          %487 = dma.hbm_to_vmem [thread:$0]  %s480, 512, %s482, %s469, 128, 128, 8
        $region60: #{lstm_maxpool_forward.1} parent=51 // pred_fallthru
          _
      $region52: #{lstm_maxpool_forward.1} parent=5 // pred_fallthru
        _
      %p488 = scmp.le.s32.totalorder 1, %s28
      %p489 = scmp.lt.s32.totalorder %s28, 3
      %p490 = pnand %p488, %p489
      %p491 = pneg %p490
      // Predicated region
      $region61: #{lstm_maxpool_forward.1} parent=5 // pred_check
        _
      $region62: #{lstm_maxpool_forward.1} parent=5 // pred_check_branch
        %493 = sbr.rel (%p490) target = $region64
      $region63: #{lstm_maxpool_forward.1} parent=5 // pred_region
        %s494 = ssub.s32 %s28, 1
        %s495 = sand.u32 %s55, 1
        %s496 = scalar_lea.sflag [#allocation11], %s495
        %s497 = sand.u32 %s55, 1
        %s498 = smul.addr %s497, 32
        %s499 = scalar_lea.vmem [#allocation10], %s498
        // Predicated region
        $region65: #{lstm_maxpool_forward.1} parent=63 // pred_check
          %p500 = pneg %p68
        $region66: #{lstm_maxpool_forward.1} parent=63 // pred_check_branch
          %502 = sbr.rel (%p500) target = $region68
        $region67: #{lstm_maxpool_forward.1} parent=63 // pred_region
          %503 = dma.done %s496, 512
        $region68: #{lstm_maxpool_forward.1} parent=63 // pred_fallthru
          _
        %s504 = sand.u32 %s33, 1
        %s505 = scalar_lea.sflag [#allocation14], %s504
        %s506 = sand.u32 %s85, 1
        %s507 = smul.addr %s506, 32
        %s508 = scalar_lea.vmem [#allocation13], %s507
        // Predicated region
        $region69: #{lstm_maxpool_forward.1} parent=63 // pred_check
          %p509 = pneg %p98
        $region70: #{lstm_maxpool_forward.1} parent=63 // pred_check_branch
          %511 = sbr.rel (%p509) target = $region72
        $region71: #{lstm_maxpool_forward.1} parent=63 // pred_region
          %512 = dma.done %s505, 512
        $region72: #{lstm_maxpool_forward.1} parent=63 // pred_fallthru
          _
        // Predicated region
        $region73: #{lstm_maxpool_forward.1} parent=63 // pred_check
          %p513 = pneg %p119
        $region74: #{lstm_maxpool_forward.1} parent=63 // pred_check_branch
          %515 = sbr.rel (%p513) target = $region76
        $region75: #{lstm_maxpool_forward.1} parent=63 // pred_region
          %516 = dma.done [#allocation14], 256
        $region76: #{lstm_maxpool_forward.1} parent=63 // pred_fallthru
          _
        // Predicated region
        $region77: #{lstm_maxpool_forward.1} parent=63 // pred_check
          %p517 = pneg %p140
        $region78: #{lstm_maxpool_forward.1} parent=63 // pred_check_branch
          %519 = sbr.rel (%p517) target = $region80
        $region79: #{lstm_maxpool_forward.1} parent=63 // pred_region
          %520 = dma.done [#allocation17], 256
        $region80: #{lstm_maxpool_forward.1} parent=63 // pred_fallthru
          _
        // Predicated region
        $region81: #{lstm_maxpool_forward.1} parent=63 // pred_check
          %p521 = pneg %p161
        $region82: #{lstm_maxpool_forward.1} parent=63 // pred_check_branch
          %523 = sbr.rel (%p521) target = $region84
        $region83: #{lstm_maxpool_forward.1} parent=63 // pred_region
          %524 = dma.done [#allocation17], 512
        $region84: #{lstm_maxpool_forward.1} parent=63 // pred_fallthru
          _
        // Predicated region
        $region85: #{lstm_maxpool_forward.1} parent=63 // pred_check
          %p525 = pneg %p182
        $region86: #{lstm_maxpool_forward.1} parent=63 // pred_check_branch
          %527 = sbr.rel (%p525) target = $region88
        $region87: #{lstm_maxpool_forward.1} parent=63 // pred_region
          %528 = dma.done [#allocation20], 512
        $region88: #{lstm_maxpool_forward.1} parent=63 // pred_fallthru
          _
        // Predicated region
        $region89: #{lstm_maxpool_forward.1} parent=63 // pred_check
          %p529 = pneg %p203
        $region90: #{lstm_maxpool_forward.1} parent=63 // pred_check_branch
          %531 = sbr.rel (%p529) target = $region92
        $region91: #{lstm_maxpool_forward.1} parent=63 // pred_region
          %532 = dma.done [#allocation20], 16
        $region92: #{lstm_maxpool_forward.1} parent=63 // pred_fallthru
          _
        // Predicated region
        $region93: #{lstm_maxpool_forward.1} parent=63 // pred_check
          %p533 = pneg %p224
        $region94: #{lstm_maxpool_forward.1} parent=63 // pred_check_branch
          %535 = sbr.rel (%p533) target = $region96
        $region95: #{lstm_maxpool_forward.1} parent=63 // pred_region
          %536 = dma.done [#allocation23], 16
        $region96: #{lstm_maxpool_forward.1} parent=63 // pred_fallthru
          _
        // Predicated region
        $region97: #{lstm_maxpool_forward.1} parent=63 // pred_check
          %p537 = pneg %p245
        $region98: #{lstm_maxpool_forward.1} parent=63 // pred_check_branch
          %539 = sbr.rel (%p537) target = $region100
        $region99: #{lstm_maxpool_forward.1} parent=63 // pred_region
          %540 = dma.done [#allocation23], 512
        $region100: #{lstm_maxpool_forward.1} parent=63 // pred_fallthru
          _
        // Predicated region
        $region101: #{lstm_maxpool_forward.1} parent=63 // pred_check
          %p541 = pneg %p266
        $region102: #{lstm_maxpool_forward.1} parent=63 // pred_check_branch
          %543 = sbr.rel (%p541) target = $region104
        $region103: #{lstm_maxpool_forward.1} parent=63 // pred_region
          %544 = dma.done [#allocation26], 512
        $region104: #{lstm_maxpool_forward.1} parent=63 // pred_fallthru
          _
        // Predicated region
        $region105: #{lstm_maxpool_forward.1} parent=63 // pred_check
          %p545 = pneg %p287
        $region106: #{lstm_maxpool_forward.1} parent=63 // pred_check_branch
          %547 = sbr.rel (%p545) target = $region108
        $region107: #{lstm_maxpool_forward.1} parent=63 // pred_region
          %548 = dma.done [#allocation26], 16
        $region108: #{lstm_maxpool_forward.1} parent=63 // pred_fallthru
          _
        %s549 = sand.u32 %s55, 1
        %s550 = scalar_lea.sflag [#allocation11], %s549
        %s551 = sand.u32 %s55, 1
        %s552 = smul.addr %s551, 32
        %s553 = scalar_lea.vmem [#allocation10], %s552
        %p554 = pneg %p68
        %p555 = pneg %p65
        %s556 = sand.u32 %s33, 1
        %s557 = scalar_lea.sflag [#allocation14], %s556
        %s558 = sand.u32 %s85, 1
        %s559 = smul.addr %s558, 32
        %s560 = scalar_lea.vmem [#allocation13], %s559
        %p561 = pneg %p98
        %p562 = pneg %p95
        %p563 = pneg %p119
        %p564 = pneg %p116
        %p565 = pneg %p140
        %p566 = pneg %p137
        %p567 = pneg %p161
        %p568 = pneg %p158
        %p569 = pneg %p182
        %p570 = pneg %p179
        %p571 = pneg %p203
        %p572 = pneg %p200
        %p573 = pneg %p224
        %p574 = pneg %p221
        %p575 = pneg %p245
        %p576 = pneg %p242
        %p577 = pneg %p266
        %p578 = pneg %p263
        %p579 = pneg %p287
        %p580 = pneg %p284
        %p581 = pneg %p313
        %p582 = pneg %p310
        %s583 = sadd.s32 %s38, %s37
        %s584 = smul.u32 4, %s583
        %s585 = ssub.s32 1, %s38
        %s586 = sadd.s32 %s585, %s37
        %s587 = smul.u32 4, %s586
        %p588 = scmp.eq.s32.totalorder %s38, 0
        // Predicated region
        $region109: #{lstm_maxpool_forward.1} parent=63 // pred_check
          %p589 = pneg %p588
        $region110: #{lstm_maxpool_forward.1} parent=63 // pred_check_branch
          %591 = sbr.rel (%p589) target = $region112
        $region111: #{lstm_maxpool_forward.1} parent=63 // pred_region
          %vm592 = vcmask 261120
          %593 = vst.msk [vmem:[#allocation4] sm:$0xff] %vm592, 0.0
          %594 = vst.msk [vmem:[#allocation5] sm:$0xff] %vm592, 0.0
          %595 = vst.msk [vmem:[#allocation7] sm:$0xff] %vm592, 0.0
          %596 = vst.msk [vmem:[#allocation8] sm:$0xff] %vm592, 0.0
          %597 = vst.msk [vmem:[#allocation6] sm:$0xff] %vm592, -3.4028235e+38
          %598 = vst.msk [vmem:[#allocation9] sm:$0xff] %vm592, -3.4028235e+38
        $region112: #{lstm_maxpool_forward.1} parent=63 // pred_fallthru
          _
        %v599 = vld [vmem:[%s499] sm:$0xff]
        %v600 = vld [vmem:[%s499 + $0x8] sm:$0xff]
        %v601 = vld [vmem:[%s499 + $0x10] sm:$0xff]
        %v602 = vld [vmem:[%s499 + $0x18] sm:$0xff]
        %v603 = vld [vmem:[#allocation15] sm:$0xff]
        %v604 = vld [vmem:[#allocation15 + $0x8] sm:$0xff]
        %v605 = vld [vmem:[#allocation21] sm:$0x1]
        %v607 = vlaneseq
        %v608 = vshrl.u32 %v607, 7
        %v609 = vsub.s32 0, %v608
        %v610 = vrot.slane %v605, %v609
        %vm612 = vcmask 130048
        %v614 = vsel %vm612, %v599, 0
        %v617 = vsel %vm612, %v600, 0
        %v620 = vsel %vm612, %v601, 0
        %v623 = vsel %vm612, %v602, 0
        %625 = vmatprep.subr.mxu0 0.0
        %626 = vmatpush1.msra.mxu0 %v603
        %627 = vmatprep.subr.mxu0 0.0
        %628 = vmatpush1.msra.mxu0 %v604
        %629 = vmatprep.subr.mxu0 0.0
        %630 = vmatpush1.msra.mxu0 0.0
        %631 = vmatprep.subr.mxu0 0.0
        %632 = vmatpush1.msra.mxu0 0.0
        %633 = vmatprep.subr.mxu0 0.0
        %634 = vmatpush1.msra.mxu0 0.0
        %635 = vmatprep.subr.mxu0 0.0
        %636 = vmatpush1.msra.mxu0 0.0
        %637 = vmatprep.subr.mxu0 0.0
        %638 = vmatpush1.msra.mxu0 0.0
        %639 = vmatprep.subr.mxu0 0.0
        %640 = vmatpush1.msra.mxu0 0.0
        %641 = vmatprep.subr.mxu0 0.0
        %642 = vmatpush1.msra.mxu0 0.0
        %643 = vmatprep.subr.mxu0 0.0
        %644 = vmatpush1.msra.mxu0 0.0
        %645 = vmatprep.subr.mxu0 0.0
        %646 = vmatpush1.msra.mxu0 0.0
        %647 = vmatprep.subr.mxu0 0.0
        %648 = vmatpush1.msra.mxu0 0.0
        %649 = vmatprep.subr.mxu0 0.0
        %650 = vmatpush1.msra.mxu0 0.0
        %651 = vmatprep.subr.mxu0 0.0
        %652 = vmatpush1.msra.mxu0 0.0
        %653 = vmatprep.subr.mxu0 0.0
        %654 = vmatpush1.msra.mxu0 0.0
        %655 = vmatprep.subr.mxu0 0.0
        %656 = vmatpush1.msra.mxu0 0.0
        %657 = vmatprep.subr.mxu0 0.0
        %658 = vmatpush1.msra.mxu0 0.0
        %659 = vmatprep.subr.mxu0 0.0
        %660 = vmatpush1.msra.mxu0 0.0
        %661 = vmatprep.subr.mxu0 0.0
        %662 = vmatpush1.msra.mxu0 0.0
        %663 = vmatprep.subr.mxu0 0.0
        %664 = vmatpush1.msra.mxu0 0.0
        %665 = vmatprep.subr.mxu0 0.0
        %666 = vmatpush1.msra.mxu0 0.0
        %667 = vmatprep.subr.mxu0 0.0
        %668 = vmatpush1.msra.mxu0 0.0
        %669 = vmatprep.subr.mxu0 0.0
        %670 = vmatpush1.msra.mxu0 0.0
        %671 = vmatprep.subr.mxu0 0.0
        %672 = vmatpush1.msra.mxu0 0.0
        %673 = vmatprep.subr.mxu0 0.0
        %674 = vmatpush1.msra.mxu0 0.0
        %675 = vmatprep.subr.mxu0 0.0
        %676 = vmatpush1.msra.mxu0 0.0
        %677 = vmatprep.subr.mxu0 0.0
        %678 = vmatpush1.msra.mxu0 0.0
        %679 = vmatprep.subr.mxu0 0.0
        %680 = vmatpush1.msra.mxu0 0.0
        %681 = vmatprep.subr.mxu0 0.0
        %682 = vmatpush1.msra.mxu0 0.0
        %683 = vmatprep.subr.mxu0 0.0
        %684 = vmatpush1.msra.mxu0 0.0
        %685 = vmatprep.subr.mxu0 0.0
        %686 = vmatpush1.msra.mxu0 0.0
        %687 = vmatprep.subr.mxu0 0.0
        %688 = vmatpush1.msra.mxu0 0.0
        %689 = vmatprep.mubr.f32.mxu0 0.0
        %690 = vmatmul.mubr.f32.gmra.mrb[0].mxu0 %v614
        %v691 = vpop.f32.mrb[0].mxu0
        %v692 = vadd.f32 %v610, %v691
        %v693 = vpop.f32.mrb[0].mxu0
        %694 = vmatprep.mubr.f32.mxu0 0.0
        %695 = vmatmul.mubr.f32.gmra.mrb[0].mxu0 %v617
        %v696 = vpop.f32.mrb[0].mxu0
        %v697 = vadd.f32 %v610, %v696
        %v698 = vpop.f32.mrb[0].mxu0
        %699 = vmatprep.mubr.f32.mxu0 0.0
        %700 = vmatmul.mubr.f32.gmra.mrb[0].mxu0 %v620
        %v701 = vpop.f32.mrb[0].mxu0
        %v702 = vadd.f32 %v610, %v701
        %v703 = vpop.f32.mrb[0].mxu0
        %704 = vmatprep.mubr.f32.mxu0 0.0
        %705 = vmatmul.mubr.f32.gmra.mrb[0].mxu0 %v623
        %v706 = vpop.f32.mrb[0].mxu0
        %v707 = vadd.f32 %v610, %v706
        %v708 = vpop.f32.mrb[0].mxu0
        %709 = vdwg.mxu0
        %710 = vst [vmem:[#allocation2] sm:$0xff] %v692
        %711 = vst [vmem:[#allocation2 + $0x8] sm:$0xff] %v697
        %712 = vst [vmem:[#allocation2 + $0x10] sm:$0xff] %v702
        %713 = vst [vmem:[#allocation2 + $0x18] sm:$0xff] %v707
        %v714 = vld [vmem:[%s508] sm:$0xff]
        %v715 = vld [vmem:[%s508 + $0x8] sm:$0xff]
        %v716 = vld [vmem:[%s508 + $0x10] sm:$0xff]
        %v717 = vld [vmem:[%s508 + $0x18] sm:$0xff]
        %v718 = vld [vmem:[#allocation16] sm:$0xff]
        %v719 = vld [vmem:[#allocation16 + $0x8] sm:$0xff]
        %v720 = vld [vmem:[#allocation22] sm:$0x1]
        %v722 = vlaneseq
        %v723 = vshrl.u32 %v722, 7
        %v724 = vsub.s32 0, %v723
        %v725 = vrot.slane %v720, %v724
        %v728 = vsel %vm612, %v714, 0
        %v731 = vsel %vm612, %v715, 0
        %v734 = vsel %vm612, %v716, 0
        %v737 = vsel %vm612, %v717, 0
        %739 = vmatprep.subr.mxu0 0.0
        %740 = vmatpush1.msra.mxu0 %v718
        %741 = vmatprep.subr.mxu0 0.0
        %742 = vmatpush1.msra.mxu0 %v719
        %743 = vmatprep.subr.mxu0 0.0
        %744 = vmatpush1.msra.mxu0 0.0
        %745 = vmatprep.subr.mxu0 0.0
        %746 = vmatpush1.msra.mxu0 0.0
        %747 = vmatprep.subr.mxu0 0.0
        %748 = vmatpush1.msra.mxu0 0.0
        %749 = vmatprep.subr.mxu0 0.0
        %750 = vmatpush1.msra.mxu0 0.0
        %751 = vmatprep.subr.mxu0 0.0
        %752 = vmatpush1.msra.mxu0 0.0
        %753 = vmatprep.subr.mxu0 0.0
        %754 = vmatpush1.msra.mxu0 0.0
        %755 = vmatprep.subr.mxu0 0.0
        %756 = vmatpush1.msra.mxu0 0.0
        %757 = vmatprep.subr.mxu0 0.0
        %758 = vmatpush1.msra.mxu0 0.0
        %759 = vmatprep.subr.mxu0 0.0
        %760 = vmatpush1.msra.mxu0 0.0
        %761 = vmatprep.subr.mxu0 0.0
        %762 = vmatpush1.msra.mxu0 0.0
        %763 = vmatprep.subr.mxu0 0.0
        %764 = vmatpush1.msra.mxu0 0.0
        %765 = vmatprep.subr.mxu0 0.0
        %766 = vmatpush1.msra.mxu0 0.0
        %767 = vmatprep.subr.mxu0 0.0
        %768 = vmatpush1.msra.mxu0 0.0
        %769 = vmatprep.subr.mxu0 0.0
        %770 = vmatpush1.msra.mxu0 0.0
        %771 = vmatprep.subr.mxu0 0.0
        %772 = vmatpush1.msra.mxu0 0.0
        %773 = vmatprep.subr.mxu0 0.0
        %774 = vmatpush1.msra.mxu0 0.0
        %775 = vmatprep.subr.mxu0 0.0
        %776 = vmatpush1.msra.mxu0 0.0
        %777 = vmatprep.subr.mxu0 0.0
        %778 = vmatpush1.msra.mxu0 0.0
        %779 = vmatprep.subr.mxu0 0.0
        %780 = vmatpush1.msra.mxu0 0.0
        %781 = vmatprep.subr.mxu0 0.0
        %782 = vmatpush1.msra.mxu0 0.0
        %783 = vmatprep.subr.mxu0 0.0
        %784 = vmatpush1.msra.mxu0 0.0
        %785 = vmatprep.subr.mxu0 0.0
        %786 = vmatpush1.msra.mxu0 0.0
        %787 = vmatprep.subr.mxu0 0.0
        %788 = vmatpush1.msra.mxu0 0.0
        %789 = vmatprep.subr.mxu0 0.0
        %790 = vmatpush1.msra.mxu0 0.0
        %791 = vmatprep.subr.mxu0 0.0
        %792 = vmatpush1.msra.mxu0 0.0
        %793 = vmatprep.subr.mxu0 0.0
        %794 = vmatpush1.msra.mxu0 0.0
        %795 = vmatprep.subr.mxu0 0.0
        %796 = vmatpush1.msra.mxu0 0.0
        %797 = vmatprep.subr.mxu0 0.0
        %798 = vmatpush1.msra.mxu0 0.0
        %799 = vmatprep.subr.mxu0 0.0
        %800 = vmatpush1.msra.mxu0 0.0
        %801 = vmatprep.subr.mxu0 0.0
        %802 = vmatpush1.msra.mxu0 0.0
        %803 = vmatprep.mubr.f32.mxu0 0.0
        %804 = vmatmul.mubr.f32.gmra.mrb[0].mxu0 %v728
        %v805 = vpop.f32.mrb[0].mxu0
        %v806 = vadd.f32 %v725, %v805
        %v807 = vpop.f32.mrb[0].mxu0
        %808 = vmatprep.mubr.f32.mxu0 0.0
        %809 = vmatmul.mubr.f32.gmra.mrb[0].mxu0 %v731
        %v810 = vpop.f32.mrb[0].mxu0
        %v811 = vadd.f32 %v725, %v810
        %v812 = vpop.f32.mrb[0].mxu0
        %813 = vmatprep.mubr.f32.mxu0 0.0
        %814 = vmatmul.mubr.f32.gmra.mrb[0].mxu0 %v734
        %v815 = vpop.f32.mrb[0].mxu0
        %v816 = vadd.f32 %v725, %v815
        %v817 = vpop.f32.mrb[0].mxu0
        %818 = vmatprep.mubr.f32.mxu0 0.0
        %819 = vmatmul.mubr.f32.gmra.mrb[0].mxu0 %v737
        %v820 = vpop.f32.mrb[0].mxu0
        %v821 = vadd.f32 %v725, %v820
        %v822 = vpop.f32.mrb[0].mxu0
        %823 = vdwg.mxu0
        %824 = vst [vmem:[#allocation3] sm:$0xff] %v806
        %825 = vst [vmem:[#allocation3 + $0x8] sm:$0xff] %v811
        %826 = vst [vmem:[#allocation3 + $0x10] sm:$0xff] %v816
        %827 = vst [vmem:[#allocation3 + $0x18] sm:$0xff] %v821
        %v828 = vld [vmem:[#allocation18] sm:$0xff]
        %v829 = vld [vmem:[#allocation18 + $0x8] sm:$0xff]
        %v830 = vld [vmem:[#allocation18 + $0x10] sm:$0xff]
        %v831 = vld [vmem:[#allocation18 + $0x18] sm:$0xff]
        %v832 = vld [vmem:[#allocation19] sm:$0xff]
        %v833 = vld [vmem:[#allocation19 + $0x8] sm:$0xff]
        %v834 = vld [vmem:[#allocation19 + $0x10] sm:$0xff]
        %v835 = vld [vmem:[#allocation19 + $0x18] sm:$0xff]
        %v836 = vld [vmem:[#allocation4] sm:$0xff]
        %v837 = vld [vmem:[#allocation5] sm:$0xff]
        %v838 = vld [vmem:[#allocation6] sm:$0xff]
        %v839 = vld [vmem:[#allocation7] sm:$0xff]
        %v840 = vld [vmem:[#allocation8] sm:$0xff]
        %v841 = vld [vmem:[#allocation9] sm:$0xff]
        %v842 = vld [vmem:[#allocation2] sm:$0xff]
        %vm843 = vcmask 261120
        %v845 = vsel %vm843, %v836, 0
        %847 = vmatprep.subr.mxu0 0.0
        %848 = vmatpush1.msra.mxu0 %v828
        %849 = vmatprep.subr.mxu0 0.0
        %850 = vmatpush1.msra.mxu0 %v829
        %851 = vmatprep.subr.mxu0 0.0
        %852 = vmatpush1.msra.mxu0 %v830
        %853 = vmatprep.subr.mxu0 0.0
        %854 = vmatpush1.msra.mxu0 %v831
        %855 = vmatprep.subr.mxu0 0.0
        %856 = vmatpush1.msra.mxu0 0.0
        %857 = vmatprep.subr.mxu0 0.0
        %858 = vmatpush1.msra.mxu0 0.0
        %859 = vmatprep.subr.mxu0 0.0
        %860 = vmatpush1.msra.mxu0 0.0
        %861 = vmatprep.subr.mxu0 0.0
        %862 = vmatpush1.msra.mxu0 0.0
        %863 = vmatprep.subr.mxu0 0.0
        %864 = vmatpush1.msra.mxu0 0.0
        %865 = vmatprep.subr.mxu0 0.0
        %866 = vmatpush1.msra.mxu0 0.0
        %867 = vmatprep.subr.mxu0 0.0
        %868 = vmatpush1.msra.mxu0 0.0
        %869 = vmatprep.subr.mxu0 0.0
        %870 = vmatpush1.msra.mxu0 0.0
        %871 = vmatprep.subr.mxu0 0.0
        %872 = vmatpush1.msra.mxu0 0.0
        %873 = vmatprep.subr.mxu0 0.0
        %874 = vmatpush1.msra.mxu0 0.0
        %875 = vmatprep.subr.mxu0 0.0
        %876 = vmatpush1.msra.mxu0 0.0
        %877 = vmatprep.subr.mxu0 0.0
        %878 = vmatpush1.msra.mxu0 0.0
        %879 = vmatprep.subr.mxu0 0.0
        %880 = vmatpush1.msra.mxu0 0.0
        %881 = vmatprep.subr.mxu0 0.0
        %882 = vmatpush1.msra.mxu0 0.0
        %883 = vmatprep.subr.mxu0 0.0
        %884 = vmatpush1.msra.mxu0 0.0
        %885 = vmatprep.subr.mxu0 0.0
        %886 = vmatpush1.msra.mxu0 0.0
        %887 = vmatprep.subr.mxu0 0.0
        %888 = vmatpush1.msra.mxu0 0.0
        %889 = vmatprep.subr.mxu0 0.0
        %890 = vmatpush1.msra.mxu0 0.0
        %891 = vmatprep.subr.mxu0 0.0
        %892 = vmatpush1.msra.mxu0 0.0
        %893 = vmatprep.subr.mxu0 0.0
        %894 = vmatpush1.msra.mxu0 0.0
        %895 = vmatprep.subr.mxu0 0.0
        %896 = vmatpush1.msra.mxu0 0.0
        %897 = vmatprep.subr.mxu0 0.0
        %898 = vmatpush1.msra.mxu0 0.0
        %899 = vmatprep.subr.mxu0 0.0
        %900 = vmatpush1.msra.mxu0 0.0
        %901 = vmatprep.subr.mxu0 0.0
        %902 = vmatpush1.msra.mxu0 0.0
        %903 = vmatprep.subr.mxu0 0.0
        %904 = vmatpush1.msra.mxu0 0.0
        %905 = vmatprep.subr.mxu0 0.0
        %906 = vmatpush1.msra.mxu0 0.0
        %907 = vmatprep.subr.mxu0 0.0
        %908 = vmatpush1.msra.mxu0 0.0
        %909 = vmatprep.subr.mxu0 0.0
        %910 = vmatpush1.msra.mxu0 0.0
        %911 = vmatprep.mubr.f32.mxu0 0.0
        %912 = vmatmul.mubr.f32.gmra.mrb[0].mxu0 %v845
        %v913 = vpop.f32.mrb[0].mxu0
        %v914 = vadd.f32 0.0, %v913
        %v915 = vpop.f32.mrb[0].mxu0
        %916 = vdwg.mxu0
        %v917 = vadd.f32 %v842, %v914
        %v918 = vmul.f32 %v917, 0.5
        %v919 = vtanh.pop %v918
        %v920 = vmul.f32 %v919, 0.5
        %v921 = vadd.f32 %v920, 0.5
        %v922 = vtanh.pop %v917
        %924 = vrot.lane.b32.xlu0 %v837, 32
        %v925 = vpop.permute.xlu0 %924
        %v927 = vmul.f32 %v921, %v925
        %929 = vrot.lane.b32.xlu0 %v922, 64
        %v930 = vpop.permute.xlu0 %929
        %v932 = vmul.f32 %v921, %v930
        %934 = vrot.lane.b32.xlu0 %v932, 32
        %v935 = vpop.permute.xlu0 %934
        %v937 = vadd.f32 %v927, %v935
        %v938 = vtanh.pop %v937
        %940 = vrot.lane.b32.xlu0 %v938, 64
        %v941 = vpop.permute.xlu0 %940
        %v943 = vmul.f32 %v921, %v941
        %945 = vrot.lane.b32.xlu0 %v943, 32
        %v946 = vpop.permute.xlu0 %945
        %v948 = vmax.f32 %v838, %v946
        %s949 = scalar_lea.vmem [#allocation3], 24
        %v950 = vld [vmem:[%s949] sm:$0xff]
        %v952 = vsel %vm843, %v839, 0
        %954 = vmatprep.subr.mxu0 0.0
        %955 = vmatpush1.msra.mxu0 %v832
        %956 = vmatprep.subr.mxu0 0.0
        %957 = vmatpush1.msra.mxu0 %v833
        %958 = vmatprep.subr.mxu0 0.0
        %959 = vmatpush1.msra.mxu0 %v834
        %960 = vmatprep.subr.mxu0 0.0
        %961 = vmatpush1.msra.mxu0 %v835
        %962 = vmatprep.subr.mxu0 0.0
        %963 = vmatpush1.msra.mxu0 0.0
        %964 = vmatprep.subr.mxu0 0.0
        %965 = vmatpush1.msra.mxu0 0.0
        %966 = vmatprep.subr.mxu0 0.0
        %967 = vmatpush1.msra.mxu0 0.0
        %968 = vmatprep.subr.mxu0 0.0
        %969 = vmatpush1.msra.mxu0 0.0
        %970 = vmatprep.subr.mxu0 0.0
        %971 = vmatpush1.msra.mxu0 0.0
        %972 = vmatprep.subr.mxu0 0.0
        %973 = vmatpush1.msra.mxu0 0.0
        %974 = vmatprep.subr.mxu0 0.0
        %975 = vmatpush1.msra.mxu0 0.0
        %976 = vmatprep.subr.mxu0 0.0
        %977 = vmatpush1.msra.mxu0 0.0
        %978 = vmatprep.subr.mxu0 0.0
        %979 = vmatpush1.msra.mxu0 0.0
        %980 = vmatprep.subr.mxu0 0.0
        %981 = vmatpush1.msra.mxu0 0.0
        %982 = vmatprep.subr.mxu0 0.0
        %983 = vmatpush1.msra.mxu0 0.0
        %984 = vmatprep.subr.mxu0 0.0
        %985 = vmatpush1.msra.mxu0 0.0
        %986 = vmatprep.subr.mxu0 0.0
        %987 = vmatpush1.msra.mxu0 0.0
        %988 = vmatprep.subr.mxu0 0.0
        %989 = vmatpush1.msra.mxu0 0.0
        %990 = vmatprep.subr.mxu0 0.0
        %991 = vmatpush1.msra.mxu0 0.0
        %992 = vmatprep.subr.mxu0 0.0
        %993 = vmatpush1.msra.mxu0 0.0
        %994 = vmatprep.subr.mxu0 0.0
        %995 = vmatpush1.msra.mxu0 0.0
        %996 = vmatprep.subr.mxu0 0.0
        %997 = vmatpush1.msra.mxu0 0.0
        %998 = vmatprep.subr.mxu0 0.0
        %999 = vmatpush1.msra.mxu0 0.0
        %1000 = vmatprep.subr.mxu0 0.0
        %1001 = vmatpush1.msra.mxu0 0.0
        %1002 = vmatprep.subr.mxu0 0.0
        %1003 = vmatpush1.msra.mxu0 0.0
        %1004 = vmatprep.subr.mxu0 0.0
        %1005 = vmatpush1.msra.mxu0 0.0
        %1006 = vmatprep.subr.mxu0 0.0
        %1007 = vmatpush1.msra.mxu0 0.0
        %1008 = vmatprep.subr.mxu0 0.0
        %1009 = vmatpush1.msra.mxu0 0.0
        %1010 = vmatprep.subr.mxu0 0.0
        %1011 = vmatpush1.msra.mxu0 0.0
        %1012 = vmatprep.subr.mxu0 0.0
        %1013 = vmatpush1.msra.mxu0 0.0
        %1014 = vmatprep.subr.mxu0 0.0
        %1015 = vmatpush1.msra.mxu0 0.0
        %1016 = vmatprep.subr.mxu0 0.0
        %1017 = vmatpush1.msra.mxu0 0.0
        %1018 = vmatprep.mubr.f32.mxu0 0.0
        %1019 = vmatmul.mubr.f32.gmra.mrb[0].mxu0 %v952
        %v1020 = vpop.f32.mrb[0].mxu0
        %v1021 = vadd.f32 0.0, %v1020
        %v1022 = vpop.f32.mrb[0].mxu0
        %1023 = vdwg.mxu0
        %v1024 = vadd.f32 %v950, %v1021
        %v1025 = vmul.f32 %v1024, 0.5
        %v1026 = vtanh.pop %v1025
        %v1027 = vmul.f32 %v1026, 0.5
        %v1028 = vadd.f32 %v1027, 0.5
        %v1029 = vtanh.pop %v1024
        %1031 = vrot.lane.b32.xlu0 %v840, 32
        %v1032 = vpop.permute.xlu0 %1031
        %v1034 = vmul.f32 %v1028, %v1032
        %1036 = vrot.lane.b32.xlu0 %v1029, 64
        %v1037 = vpop.permute.xlu0 %1036
        %v1039 = vmul.f32 %v1028, %v1037
        %1041 = vrot.lane.b32.xlu0 %v1039, 32
        %v1042 = vpop.permute.xlu0 %1041
        %v1044 = vadd.f32 %v1034, %v1042
        %v1045 = vtanh.pop %v1044
        %1047 = vrot.lane.b32.xlu0 %v1045, 64
        %v1048 = vpop.permute.xlu0 %1047
        %v1050 = vmul.f32 %v1028, %v1048
        %1052 = vrot.lane.b32.xlu0 %v1050, 32
        %v1053 = vpop.permute.xlu0 %1052
        %v1055 = vmax.f32 %v841, %v1053
        %s1056 = scalar_lea.vmem [#allocation2], 8
        %v1057 = vld [vmem:[%s1056] sm:$0xff]
        %v1058 = vsel %vm843, %v946, 0
        %1060 = vmatprep.subr.mxu0 0.0
        %1061 = vmatpush1.msra.mxu0 %v828
        %1062 = vmatprep.subr.mxu0 0.0
        %1063 = vmatpush1.msra.mxu0 %v829
        %1064 = vmatprep.subr.mxu0 0.0
        %1065 = vmatpush1.msra.mxu0 %v830
        %1066 = vmatprep.subr.mxu0 0.0
        %1067 = vmatpush1.msra.mxu0 %v831
        %1068 = vmatprep.subr.mxu0 0.0
        %1069 = vmatpush1.msra.mxu0 0.0
        %1070 = vmatprep.subr.mxu0 0.0
        %1071 = vmatpush1.msra.mxu0 0.0
        %1072 = vmatprep.subr.mxu0 0.0
        %1073 = vmatpush1.msra.mxu0 0.0
        %1074 = vmatprep.subr.mxu0 0.0
        %1075 = vmatpush1.msra.mxu0 0.0
        %1076 = vmatprep.subr.mxu0 0.0
        %1077 = vmatpush1.msra.mxu0 0.0
        %1078 = vmatprep.subr.mxu0 0.0
        %1079 = vmatpush1.msra.mxu0 0.0
        %1080 = vmatprep.subr.mxu0 0.0
        %1081 = vmatpush1.msra.mxu0 0.0
        %1082 = vmatprep.subr.mxu0 0.0
        %1083 = vmatpush1.msra.mxu0 0.0
        %1084 = vmatprep.subr.mxu0 0.0
        %1085 = vmatpush1.msra.mxu0 0.0
        %1086 = vmatprep.subr.mxu0 0.0
        %1087 = vmatpush1.msra.mxu0 0.0
        %1088 = vmatprep.subr.mxu0 0.0
        %1089 = vmatpush1.msra.mxu0 0.0
        %1090 = vmatprep.subr.mxu0 0.0
        %1091 = vmatpush1.msra.mxu0 0.0
        %1092 = vmatprep.subr.mxu0 0.0
        %1093 = vmatpush1.msra.mxu0 0.0
        %1094 = vmatprep.subr.mxu0 0.0
        %1095 = vmatpush1.msra.mxu0 0.0
        %1096 = vmatprep.subr.mxu0 0.0
        %1097 = vmatpush1.msra.mxu0 0.0
        %1098 = vmatprep.subr.mxu0 0.0
        %1099 = vmatpush1.msra.mxu0 0.0
        %1100 = vmatprep.subr.mxu0 0.0
        %1101 = vmatpush1.msra.mxu0 0.0
        %1102 = vmatprep.subr.mxu0 0.0
        %1103 = vmatpush1.msra.mxu0 0.0
        %1104 = vmatprep.subr.mxu0 0.0
        %1105 = vmatpush1.msra.mxu0 0.0
        %1106 = vmatprep.subr.mxu0 0.0
        %1107 = vmatpush1.msra.mxu0 0.0
        %1108 = vmatprep.subr.mxu0 0.0
        %1109 = vmatpush1.msra.mxu0 0.0
        %1110 = vmatprep.subr.mxu0 0.0
        %1111 = vmatpush1.msra.mxu0 0.0
        %1112 = vmatprep.subr.mxu0 0.0
        %1113 = vmatpush1.msra.mxu0 0.0
        %1114 = vmatprep.subr.mxu0 0.0
        %1115 = vmatpush1.msra.mxu0 0.0
        %1116 = vmatprep.subr.mxu0 0.0
        %1117 = vmatpush1.msra.mxu0 0.0
        %1118 = vmatprep.subr.mxu0 0.0
        %1119 = vmatpush1.msra.mxu0 0.0
        %1120 = vmatprep.subr.mxu0 0.0
        %1121 = vmatpush1.msra.mxu0 0.0
        %1122 = vmatprep.subr.mxu0 0.0
        %1123 = vmatpush1.msra.mxu0 0.0
        %1124 = vmatprep.mubr.f32.mxu0 0.0
        %1125 = vmatmul.mubr.f32.gmra.mrb[0].mxu0 %v1058
        %v1126 = vpop.f32.mrb[0].mxu0
        %v1127 = vadd.f32 0.0, %v1126
        %v1128 = vpop.f32.mrb[0].mxu0
        %1129 = vdwg.mxu0
        %v1130 = vadd.f32 %v1057, %v1127
        %v1131 = vmul.f32 %v1130, 0.5
        %v1132 = vtanh.pop %v1131
        %v1133 = vmul.f32 %v1132, 0.5
        %v1134 = vadd.f32 %v1133, 0.5
        %v1135 = vtanh.pop %v1130
        %v1136 = vmul.f32 %v1134, %v937
        %1138 = vrot.lane.b32.xlu0 %v1135, 64
        %v1139 = vpop.permute.xlu0 %1138
        %v1141 = vmul.f32 %v1134, %v1139
        %1143 = vrot.lane.b32.xlu0 %v1141, 32
        %v1144 = vpop.permute.xlu0 %1143
        %v1146 = vadd.f32 %v1136, %v1144
        %v1147 = vtanh.pop %v1146
        %1149 = vrot.lane.b32.xlu0 %v1147, 64
        %v1150 = vpop.permute.xlu0 %1149
        %v1152 = vmul.f32 %v1134, %v1150
        %1154 = vrot.lane.b32.xlu0 %v1152, 32
        %v1155 = vpop.permute.xlu0 %1154
        %v1157 = vmax.f32 %v948, %v1155
        %s1158 = scalar_lea.vmem [#allocation3], 16
        %v1159 = vld [vmem:[%s1158] sm:$0xff]
        %v1160 = vsel %vm843, %v1053, 0
        %1162 = vmatprep.subr.mxu0 0.0
        %1163 = vmatpush1.msra.mxu0 %v832
        %1164 = vmatprep.subr.mxu0 0.0
        %1165 = vmatpush1.msra.mxu0 %v833
        %1166 = vmatprep.subr.mxu0 0.0
        %1167 = vmatpush1.msra.mxu0 %v834
        %1168 = vmatprep.subr.mxu0 0.0
        %1169 = vmatpush1.msra.mxu0 %v835
        %1170 = vmatprep.subr.mxu0 0.0
        %1171 = vmatpush1.msra.mxu0 0.0
        %1172 = vmatprep.subr.mxu0 0.0
        %1173 = vmatpush1.msra.mxu0 0.0
        %1174 = vmatprep.subr.mxu0 0.0
        %1175 = vmatpush1.msra.mxu0 0.0
        %1176 = vmatprep.subr.mxu0 0.0
        %1177 = vmatpush1.msra.mxu0 0.0
        %1178 = vmatprep.subr.mxu0 0.0
        %1179 = vmatpush1.msra.mxu0 0.0
        %1180 = vmatprep.subr.mxu0 0.0
        %1181 = vmatpush1.msra.mxu0 0.0
        %1182 = vmatprep.subr.mxu0 0.0
        %1183 = vmatpush1.msra.mxu0 0.0
        %1184 = vmatprep.subr.mxu0 0.0
        %1185 = vmatpush1.msra.mxu0 0.0
        %1186 = vmatprep.subr.mxu0 0.0
        %1187 = vmatpush1.msra.mxu0 0.0
        %1188 = vmatprep.subr.mxu0 0.0
        %1189 = vmatpush1.msra.mxu0 0.0
        %1190 = vmatprep.subr.mxu0 0.0
        %1191 = vmatpush1.msra.mxu0 0.0
        %1192 = vmatprep.subr.mxu0 0.0
        %1193 = vmatpush1.msra.mxu0 0.0
        %1194 = vmatprep.subr.mxu0 0.0
        %1195 = vmatpush1.msra.mxu0 0.0
        %1196 = vmatprep.subr.mxu0 0.0
        %1197 = vmatpush1.msra.mxu0 0.0
        %1198 = vmatprep.subr.mxu0 0.0
        %1199 = vmatpush1.msra.mxu0 0.0
        %1200 = vmatprep.subr.mxu0 0.0
        %1201 = vmatpush1.msra.mxu0 0.0
        %1202 = vmatprep.subr.mxu0 0.0
        %1203 = vmatpush1.msra.mxu0 0.0
        %1204 = vmatprep.subr.mxu0 0.0
        %1205 = vmatpush1.msra.mxu0 0.0
        %1206 = vmatprep.subr.mxu0 0.0
        %1207 = vmatpush1.msra.mxu0 0.0
        %1208 = vmatprep.subr.mxu0 0.0
        %1209 = vmatpush1.msra.mxu0 0.0
        %1210 = vmatprep.subr.mxu0 0.0
        %1211 = vmatpush1.msra.mxu0 0.0
        %1212 = vmatprep.subr.mxu0 0.0
        %1213 = vmatpush1.msra.mxu0 0.0
        %1214 = vmatprep.subr.mxu0 0.0
        %1215 = vmatpush1.msra.mxu0 0.0
        %1216 = vmatprep.subr.mxu0 0.0
        %1217 = vmatpush1.msra.mxu0 0.0
        %1218 = vmatprep.subr.mxu0 0.0
        %1219 = vmatpush1.msra.mxu0 0.0
        %1220 = vmatprep.subr.mxu0 0.0
        %1221 = vmatpush1.msra.mxu0 0.0
        %1222 = vmatprep.subr.mxu0 0.0
        %1223 = vmatpush1.msra.mxu0 0.0
        %1224 = vmatprep.subr.mxu0 0.0
        %1225 = vmatpush1.msra.mxu0 0.0
        %1226 = vmatprep.mubr.f32.mxu0 0.0
        %1227 = vmatmul.mubr.f32.gmra.mrb[0].mxu0 %v1160
        %v1228 = vpop.f32.mrb[0].mxu0
        %v1229 = vadd.f32 0.0, %v1228
        %v1230 = vpop.f32.mrb[0].mxu0
        %1231 = vdwg.mxu0
        %v1232 = vadd.f32 %v1159, %v1229
        %v1233 = vmul.f32 %v1232, 0.5
        %v1234 = vtanh.pop %v1233
        %v1235 = vmul.f32 %v1234, 0.5
        %v1236 = vadd.f32 %v1235, 0.5
        %v1237 = vtanh.pop %v1232
        %v1238 = vmul.f32 %v1236, %v1044
        %1240 = vrot.lane.b32.xlu0 %v1237, 64
        %v1241 = vpop.permute.xlu0 %1240
        %v1243 = vmul.f32 %v1236, %v1241
        %1245 = vrot.lane.b32.xlu0 %v1243, 32
        %v1246 = vpop.permute.xlu0 %1245
        %v1248 = vadd.f32 %v1238, %v1246
        %v1249 = vtanh.pop %v1248
        %1251 = vrot.lane.b32.xlu0 %v1249, 64
        %v1252 = vpop.permute.xlu0 %1251
        %v1254 = vmul.f32 %v1236, %v1252
        %1256 = vrot.lane.b32.xlu0 %v1254, 32
        %v1257 = vpop.permute.xlu0 %1256
        %v1259 = vmax.f32 %v1055, %v1257
        %s1260 = scalar_lea.vmem [#allocation2], 16
        %v1261 = vld [vmem:[%s1260] sm:$0xff]
        %v1262 = vsel %vm843, %v1155, 0
        %1264 = vmatprep.subr.mxu0 0.0
        %1265 = vmatpush1.msra.mxu0 %v828
        %1266 = vmatprep.subr.mxu0 0.0
        %1267 = vmatpush1.msra.mxu0 %v829
        %1268 = vmatprep.subr.mxu0 0.0
        %1269 = vmatpush1.msra.mxu0 %v830
        %1270 = vmatprep.subr.mxu0 0.0
        %1271 = vmatpush1.msra.mxu0 %v831
        %1272 = vmatprep.subr.mxu0 0.0
        %1273 = vmatpush1.msra.mxu0 0.0
        %1274 = vmatprep.subr.mxu0 0.0
        %1275 = vmatpush1.msra.mxu0 0.0
        %1276 = vmatprep.subr.mxu0 0.0
        %1277 = vmatpush1.msra.mxu0 0.0
        %1278 = vmatprep.subr.mxu0 0.0
        %1279 = vmatpush1.msra.mxu0 0.0
        %1280 = vmatprep.subr.mxu0 0.0
        %1281 = vmatpush1.msra.mxu0 0.0
        %1282 = vmatprep.subr.mxu0 0.0
        %1283 = vmatpush1.msra.mxu0 0.0
        %1284 = vmatprep.subr.mxu0 0.0
        %1285 = vmatpush1.msra.mxu0 0.0
        %1286 = vmatprep.subr.mxu0 0.0
        %1287 = vmatpush1.msra.mxu0 0.0
        %1288 = vmatprep.subr.mxu0 0.0
        %1289 = vmatpush1.msra.mxu0 0.0
        %1290 = vmatprep.subr.mxu0 0.0
        %1291 = vmatpush1.msra.mxu0 0.0
        %1292 = vmatprep.subr.mxu0 0.0
        %1293 = vmatpush1.msra.mxu0 0.0
        %1294 = vmatprep.subr.mxu0 0.0
        %1295 = vmatpush1.msra.mxu0 0.0
        %1296 = vmatprep.subr.mxu0 0.0
        %1297 = vmatpush1.msra.mxu0 0.0
        %1298 = vmatprep.subr.mxu0 0.0
        %1299 = vmatpush1.msra.mxu0 0.0
        %1300 = vmatprep.subr.mxu0 0.0
        %1301 = vmatpush1.msra.mxu0 0.0
        %1302 = vmatprep.subr.mxu0 0.0
        %1303 = vmatpush1.msra.mxu0 0.0
        %1304 = vmatprep.subr.mxu0 0.0
        %1305 = vmatpush1.msra.mxu0 0.0
        %1306 = vmatprep.subr.mxu0 0.0
        %1307 = vmatpush1.msra.mxu0 0.0
        %1308 = vmatprep.subr.mxu0 0.0
        %1309 = vmatpush1.msra.mxu0 0.0
        %1310 = vmatprep.subr.mxu0 0.0
        %1311 = vmatpush1.msra.mxu0 0.0
        %1312 = vmatprep.subr.mxu0 0.0
        %1313 = vmatpush1.msra.mxu0 0.0
        %1314 = vmatprep.subr.mxu0 0.0
        %1315 = vmatpush1.msra.mxu0 0.0
        %1316 = vmatprep.subr.mxu0 0.0
        %1317 = vmatpush1.msra.mxu0 0.0
        %1318 = vmatprep.subr.mxu0 0.0
        %1319 = vmatpush1.msra.mxu0 0.0
        %1320 = vmatprep.subr.mxu0 0.0
        %1321 = vmatpush1.msra.mxu0 0.0
        %1322 = vmatprep.subr.mxu0 0.0
        %1323 = vmatpush1.msra.mxu0 0.0
        %1324 = vmatprep.subr.mxu0 0.0
        %1325 = vmatpush1.msra.mxu0 0.0
        %1326 = vmatprep.subr.mxu0 0.0
        %1327 = vmatpush1.msra.mxu0 0.0
        %1328 = vmatprep.mubr.f32.mxu0 0.0
        %1329 = vmatmul.mubr.f32.gmra.mrb[0].mxu0 %v1262
        %v1330 = vpop.f32.mrb[0].mxu0
        %v1331 = vadd.f32 0.0, %v1330
        %v1332 = vpop.f32.mrb[0].mxu0
        %1333 = vdwg.mxu0
        %v1334 = vadd.f32 %v1261, %v1331
        %v1335 = vmul.f32 %v1334, 0.5
        %v1336 = vtanh.pop %v1335
        %v1337 = vmul.f32 %v1336, 0.5
        %v1338 = vadd.f32 %v1337, 0.5
        %v1339 = vtanh.pop %v1334
        %v1340 = vmul.f32 %v1338, %v1146
        %1342 = vrot.lane.b32.xlu0 %v1339, 64
        %v1343 = vpop.permute.xlu0 %1342
        %v1345 = vmul.f32 %v1338, %v1343
        %1347 = vrot.lane.b32.xlu0 %v1345, 32
        %v1348 = vpop.permute.xlu0 %1347
        %v1350 = vadd.f32 %v1340, %v1348
        %v1351 = vtanh.pop %v1350
        %1353 = vrot.lane.b32.xlu0 %v1351, 64
        %v1354 = vpop.permute.xlu0 %1353
        %v1356 = vmul.f32 %v1338, %v1354
        %1358 = vrot.lane.b32.xlu0 %v1356, 32
        %v1359 = vpop.permute.xlu0 %1358
        %v1361 = vmax.f32 %v1157, %v1359
        %s1362 = scalar_lea.vmem [#allocation3], 8
        %v1363 = vld [vmem:[%s1362] sm:$0xff]
        %v1364 = vsel %vm843, %v1257, 0
        %1366 = vmatprep.subr.mxu0 0.0
        %1367 = vmatpush1.msra.mxu0 %v832
        %1368 = vmatprep.subr.mxu0 0.0
        %1369 = vmatpush1.msra.mxu0 %v833
        %1370 = vmatprep.subr.mxu0 0.0
        %1371 = vmatpush1.msra.mxu0 %v834
        %1372 = vmatprep.subr.mxu0 0.0
        %1373 = vmatpush1.msra.mxu0 %v835
        %1374 = vmatprep.subr.mxu0 0.0
        %1375 = vmatpush1.msra.mxu0 0.0
        %1376 = vmatprep.subr.mxu0 0.0
        %1377 = vmatpush1.msra.mxu0 0.0
        %1378 = vmatprep.subr.mxu0 0.0
        %1379 = vmatpush1.msra.mxu0 0.0
        %1380 = vmatprep.subr.mxu0 0.0
        %1381 = vmatpush1.msra.mxu0 0.0
        %1382 = vmatprep.subr.mxu0 0.0
        %1383 = vmatpush1.msra.mxu0 0.0
        %1384 = vmatprep.subr.mxu0 0.0
        %1385 = vmatpush1.msra.mxu0 0.0
        %1386 = vmatprep.subr.mxu0 0.0
        %1387 = vmatpush1.msra.mxu0 0.0
        %1388 = vmatprep.subr.mxu0 0.0
        %1389 = vmatpush1.msra.mxu0 0.0
        %1390 = vmatprep.subr.mxu0 0.0
        %1391 = vmatpush1.msra.mxu0 0.0
        %1392 = vmatprep.subr.mxu0 0.0
        %1393 = vmatpush1.msra.mxu0 0.0
        %1394 = vmatprep.subr.mxu0 0.0
        %1395 = vmatpush1.msra.mxu0 0.0
        %1396 = vmatprep.subr.mxu0 0.0
        %1397 = vmatpush1.msra.mxu0 0.0
        %1398 = vmatprep.subr.mxu0 0.0
        %1399 = vmatpush1.msra.mxu0 0.0
        %1400 = vmatprep.subr.mxu0 0.0
        %1401 = vmatpush1.msra.mxu0 0.0
        %1402 = vmatprep.subr.mxu0 0.0
        %1403 = vmatpush1.msra.mxu0 0.0
        %1404 = vmatprep.subr.mxu0 0.0
        %1405 = vmatpush1.msra.mxu0 0.0
        %1406 = vmatprep.subr.mxu0 0.0
        %1407 = vmatpush1.msra.mxu0 0.0
        %1408 = vmatprep.subr.mxu0 0.0
        %1409 = vmatpush1.msra.mxu0 0.0
        %1410 = vmatprep.subr.mxu0 0.0
        %1411 = vmatpush1.msra.mxu0 0.0
        %1412 = vmatprep.subr.mxu0 0.0
        %1413 = vmatpush1.msra.mxu0 0.0
        %1414 = vmatprep.subr.mxu0 0.0
        %1415 = vmatpush1.msra.mxu0 0.0
        %1416 = vmatprep.subr.mxu0 0.0
        %1417 = vmatpush1.msra.mxu0 0.0
        %1418 = vmatprep.subr.mxu0 0.0
        %1419 = vmatpush1.msra.mxu0 0.0
        %1420 = vmatprep.subr.mxu0 0.0
        %1421 = vmatpush1.msra.mxu0 0.0
        %1422 = vmatprep.subr.mxu0 0.0
        %1423 = vmatpush1.msra.mxu0 0.0
        %1424 = vmatprep.subr.mxu0 0.0
        %1425 = vmatpush1.msra.mxu0 0.0
        %1426 = vmatprep.subr.mxu0 0.0
        %1427 = vmatpush1.msra.mxu0 0.0
        %1428 = vmatprep.subr.mxu0 0.0
        %1429 = vmatpush1.msra.mxu0 0.0
        %1430 = vmatprep.mubr.f32.mxu0 0.0
        %1431 = vmatmul.mubr.f32.gmra.mrb[0].mxu0 %v1364
        %v1432 = vpop.f32.mrb[0].mxu0
        %v1433 = vadd.f32 0.0, %v1432
        %v1434 = vpop.f32.mrb[0].mxu0
        %1435 = vdwg.mxu0
        %v1436 = vadd.f32 %v1363, %v1433
        %v1437 = vmul.f32 %v1436, 0.5
        %v1438 = vtanh.pop %v1437
        %v1439 = vmul.f32 %v1438, 0.5
        %v1440 = vadd.f32 %v1439, 0.5
        %v1441 = vtanh.pop %v1436
        %v1442 = vmul.f32 %v1440, %v1248
        %1444 = vrot.lane.b32.xlu0 %v1441, 64
        %v1445 = vpop.permute.xlu0 %1444
        %v1447 = vmul.f32 %v1440, %v1445
        %1449 = vrot.lane.b32.xlu0 %v1447, 32
        %v1450 = vpop.permute.xlu0 %1449
        %v1452 = vadd.f32 %v1442, %v1450
        %v1453 = vtanh.pop %v1452
        %1455 = vrot.lane.b32.xlu0 %v1453, 64
        %v1456 = vpop.permute.xlu0 %1455
        %v1458 = vmul.f32 %v1440, %v1456
        %1460 = vrot.lane.b32.xlu0 %v1458, 32
        %v1461 = vpop.permute.xlu0 %1460
        %v1463 = vmax.f32 %v1259, %v1461
        %s1464 = scalar_lea.vmem [#allocation2], 24
        %v1465 = vld [vmem:[%s1464] sm:$0xff]
        %v1466 = vsel %vm843, %v1359, 0
        %1468 = vmatprep.subr.mxu0 0.0
        %1469 = vmatpush1.msra.mxu0 %v828
        %1470 = vmatprep.subr.mxu0 0.0
        %1471 = vmatpush1.msra.mxu0 %v829
        %1472 = vmatprep.subr.mxu0 0.0
        %1473 = vmatpush1.msra.mxu0 %v830
        %1474 = vmatprep.subr.mxu0 0.0
        %1475 = vmatpush1.msra.mxu0 %v831
        %1476 = vmatprep.subr.mxu0 0.0
        %1477 = vmatpush1.msra.mxu0 0.0
        %1478 = vmatprep.subr.mxu0 0.0
        %1479 = vmatpush1.msra.mxu0 0.0
        %1480 = vmatprep.subr.mxu0 0.0
        %1481 = vmatpush1.msra.mxu0 0.0
        %1482 = vmatprep.subr.mxu0 0.0
        %1483 = vmatpush1.msra.mxu0 0.0
        %1484 = vmatprep.subr.mxu0 0.0
        %1485 = vmatpush1.msra.mxu0 0.0
        %1486 = vmatprep.subr.mxu0 0.0
        %1487 = vmatpush1.msra.mxu0 0.0
        %1488 = vmatprep.subr.mxu0 0.0
        %1489 = vmatpush1.msra.mxu0 0.0
        %1490 = vmatprep.subr.mxu0 0.0
        %1491 = vmatpush1.msra.mxu0 0.0
        %1492 = vmatprep.subr.mxu0 0.0
        %1493 = vmatpush1.msra.mxu0 0.0
        %1494 = vmatprep.subr.mxu0 0.0
        %1495 = vmatpush1.msra.mxu0 0.0
        %1496 = vmatprep.subr.mxu0 0.0
        %1497 = vmatpush1.msra.mxu0 0.0
        %1498 = vmatprep.subr.mxu0 0.0
        %1499 = vmatpush1.msra.mxu0 0.0
        %1500 = vmatprep.subr.mxu0 0.0
        %1501 = vmatpush1.msra.mxu0 0.0
        %1502 = vmatprep.subr.mxu0 0.0
        %1503 = vmatpush1.msra.mxu0 0.0
        %1504 = vmatprep.subr.mxu0 0.0
        %1505 = vmatpush1.msra.mxu0 0.0
        %1506 = vmatprep.subr.mxu0 0.0
        %1507 = vmatpush1.msra.mxu0 0.0
        %1508 = vmatprep.subr.mxu0 0.0
        %1509 = vmatpush1.msra.mxu0 0.0
        %1510 = vmatprep.subr.mxu0 0.0
        %1511 = vmatpush1.msra.mxu0 0.0
        %1512 = vmatprep.subr.mxu0 0.0
        %1513 = vmatpush1.msra.mxu0 0.0
        %1514 = vmatprep.subr.mxu0 0.0
        %1515 = vmatpush1.msra.mxu0 0.0
        %1516 = vmatprep.subr.mxu0 0.0
        %1517 = vmatpush1.msra.mxu0 0.0
        %1518 = vmatprep.subr.mxu0 0.0
        %1519 = vmatpush1.msra.mxu0 0.0
        %1520 = vmatprep.subr.mxu0 0.0
        %1521 = vmatpush1.msra.mxu0 0.0
        %1522 = vmatprep.subr.mxu0 0.0
        %1523 = vmatpush1.msra.mxu0 0.0
        %1524 = vmatprep.subr.mxu0 0.0
        %1525 = vmatpush1.msra.mxu0 0.0
        %1526 = vmatprep.subr.mxu0 0.0
        %1527 = vmatpush1.msra.mxu0 0.0
        %1528 = vmatprep.subr.mxu0 0.0
        %1529 = vmatpush1.msra.mxu0 0.0
        %1530 = vmatprep.subr.mxu0 0.0
        %1531 = vmatpush1.msra.mxu0 0.0
        %1532 = vmatprep.mubr.f32.mxu0 0.0
        %1533 = vmatmul.mubr.f32.gmra.mrb[0].mxu0 %v1466
        %v1534 = vpop.f32.mrb[0].mxu0
        %v1535 = vadd.f32 0.0, %v1534
        %v1536 = vpop.f32.mrb[0].mxu0
        %1537 = vdwg.mxu0
        %v1538 = vadd.f32 %v1465, %v1535
        %v1539 = vmul.f32 %v1538, 0.5
        %v1540 = vtanh.pop %v1539
        %v1541 = vmul.f32 %v1540, 0.5
        %v1542 = vadd.f32 %v1541, 0.5
        %v1543 = vtanh.pop %v1538
        %v1544 = vmul.f32 %v1542, %v1350
        %1546 = vrot.lane.b32.xlu0 %v1543, 64
        %v1547 = vpop.permute.xlu0 %1546
        %v1549 = vmul.f32 %v1542, %v1547
        %1551 = vrot.lane.b32.xlu0 %v1549, 32
        %v1552 = vpop.permute.xlu0 %1551
        %v1554 = vadd.f32 %v1544, %v1552
        %v1555 = vtanh.pop %v1554
        %1557 = vrot.lane.b32.xlu0 %v1555, 64
        %v1558 = vpop.permute.xlu0 %1557
        %v1560 = vmul.f32 %v1542, %v1558
        %1562 = vrot.lane.b32.xlu0 %v1560, 32
        %v1563 = vpop.permute.xlu0 %1562
        %v1565 = vmax.f32 %v1361, %v1563
        %v1566 = vld [vmem:[#allocation3] sm:$0xff]
        %v1567 = vsel %vm843, %v1461, 0
        %1569 = vmatprep.subr.mxu0 0.0
        %1570 = vmatpush1.msra.mxu0 %v832
        %1571 = vmatprep.subr.mxu0 0.0
        %1572 = vmatpush1.msra.mxu0 %v833
        %1573 = vmatprep.subr.mxu0 0.0
        %1574 = vmatpush1.msra.mxu0 %v834
        %1575 = vmatprep.subr.mxu0 0.0
        %1576 = vmatpush1.msra.mxu0 %v835
        %1577 = vmatprep.subr.mxu0 0.0
        %1578 = vmatpush1.msra.mxu0 0.0
        %1579 = vmatprep.subr.mxu0 0.0
        %1580 = vmatpush1.msra.mxu0 0.0
        %1581 = vmatprep.subr.mxu0 0.0
        %1582 = vmatpush1.msra.mxu0 0.0
        %1583 = vmatprep.subr.mxu0 0.0
        %1584 = vmatpush1.msra.mxu0 0.0
        %1585 = vmatprep.subr.mxu0 0.0
        %1586 = vmatpush1.msra.mxu0 0.0
        %1587 = vmatprep.subr.mxu0 0.0
        %1588 = vmatpush1.msra.mxu0 0.0
        %1589 = vmatprep.subr.mxu0 0.0
        %1590 = vmatpush1.msra.mxu0 0.0
        %1591 = vmatprep.subr.mxu0 0.0
        %1592 = vmatpush1.msra.mxu0 0.0
        %1593 = vmatprep.subr.mxu0 0.0
        %1594 = vmatpush1.msra.mxu0 0.0
        %1595 = vmatprep.subr.mxu0 0.0
        %1596 = vmatpush1.msra.mxu0 0.0
        %1597 = vmatprep.subr.mxu0 0.0
        %1598 = vmatpush1.msra.mxu0 0.0
        %1599 = vmatprep.subr.mxu0 0.0
        %1600 = vmatpush1.msra.mxu0 0.0
        %1601 = vmatprep.subr.mxu0 0.0
        %1602 = vmatpush1.msra.mxu0 0.0
        %1603 = vmatprep.subr.mxu0 0.0
        %1604 = vmatpush1.msra.mxu0 0.0
        %1605 = vmatprep.subr.mxu0 0.0
        %1606 = vmatpush1.msra.mxu0 0.0
        %1607 = vmatprep.subr.mxu0 0.0
        %1608 = vmatpush1.msra.mxu0 0.0
        %1609 = vmatprep.subr.mxu0 0.0
        %1610 = vmatpush1.msra.mxu0 0.0
        %1611 = vmatprep.subr.mxu0 0.0
        %1612 = vmatpush1.msra.mxu0 0.0
        %1613 = vmatprep.subr.mxu0 0.0
        %1614 = vmatpush1.msra.mxu0 0.0
        %1615 = vmatprep.subr.mxu0 0.0
        %1616 = vmatpush1.msra.mxu0 0.0
        %1617 = vmatprep.subr.mxu0 0.0
        %1618 = vmatpush1.msra.mxu0 0.0
        %1619 = vmatprep.subr.mxu0 0.0
        %1620 = vmatpush1.msra.mxu0 0.0
        %1621 = vmatprep.subr.mxu0 0.0
        %1622 = vmatpush1.msra.mxu0 0.0
        %1623 = vmatprep.subr.mxu0 0.0
        %1624 = vmatpush1.msra.mxu0 0.0
        %1625 = vmatprep.subr.mxu0 0.0
        %1626 = vmatpush1.msra.mxu0 0.0
        %1627 = vmatprep.subr.mxu0 0.0
        %1628 = vmatpush1.msra.mxu0 0.0
        %1629 = vmatprep.subr.mxu0 0.0
        %1630 = vmatpush1.msra.mxu0 0.0
        %1631 = vmatprep.subr.mxu0 0.0
        %1632 = vmatpush1.msra.mxu0 0.0
        %1633 = vmatprep.mubr.f32.mxu0 0.0
        %1634 = vmatmul.mubr.f32.gmra.mrb[0].mxu0 %v1567
        %v1635 = vpop.f32.mrb[0].mxu0
        %v1636 = vadd.f32 0.0, %v1635
        %v1637 = vpop.f32.mrb[0].mxu0
        %1638 = vdwg.mxu0
        %v1639 = vadd.f32 %v1566, %v1636
        %v1640 = vmul.f32 %v1639, 0.5
        %v1641 = vtanh.pop %v1640
        %v1642 = vmul.f32 %v1641, 0.5
        %v1643 = vadd.f32 %v1642, 0.5
        %v1644 = vtanh.pop %v1639
        %v1645 = vmul.f32 %v1643, %v1452
        %1647 = vrot.lane.b32.xlu0 %v1644, 64
        %v1648 = vpop.permute.xlu0 %1647
        %v1650 = vmul.f32 %v1643, %v1648
        %1652 = vrot.lane.b32.xlu0 %v1650, 32
        %v1653 = vpop.permute.xlu0 %1652
        %v1655 = vadd.f32 %v1645, %v1653
        %v1656 = vtanh.pop %v1655
        %1658 = vrot.lane.b32.xlu0 %v1656, 64
        %v1659 = vpop.permute.xlu0 %1658
        %v1661 = vmul.f32 %v1643, %v1659
        %1663 = vrot.lane.b32.xlu0 %v1661, 32
        %v1664 = vpop.permute.xlu0 %1663
        %v1666 = vmax.f32 %v1463, %v1664
        %1667 = vst.msk [vmem:[#allocation4] sm:$0xff] %vm843, %v1563
        %1669 = vrot.lane.b32.xlu0 %v1554, 96
        %v1670 = vpop.permute.xlu0 %1669
        %1672 = vst.msk [vmem:[#allocation5] sm:$0xff] %vm843, %v1670
        %1673 = vst.msk [vmem:[#allocation6] sm:$0xff] %vm843, %v1565
        %1674 = vst.msk [vmem:[#allocation7] sm:$0xff] %vm843, %v1664
        %1676 = vrot.lane.b32.xlu0 %v1655, 96
        %v1677 = vpop.permute.xlu0 %1676
        %1679 = vst.msk [vmem:[#allocation8] sm:$0xff] %vm843, %v1677
        %1680 = vst.msk [vmem:[#allocation9] sm:$0xff] %vm843, %v1666
        %p1681 = scmp.eq.s32.totalorder %s38, 1
        // Predicated region
        $region113: #{lstm_maxpool_forward.1} parent=63 // pred_check
          %p1682 = pneg %p1681
        $region114: #{lstm_maxpool_forward.1} parent=63 // pred_check_branch
          %1684 = sbr.rel (%p1682) target = $region116
        $region115: #{lstm_maxpool_forward.1} parent=63 // pred_region
          %v1685 = vld [vmem:[#allocation6] sm:$0xff]
          %v1686 = vld [vmem:[#allocation9] sm:$0xff]
          %v1687 = vld [vmem:[#allocation24] sm:$0xff]
          %v1688 = vld [vmem:[#allocation24 + $0x8] sm:$0xff]
          %v1689 = vld [vmem:[#allocation24 + $0x10] sm:$0xff]
          %v1690 = vld [vmem:[#allocation24 + $0x18] sm:$0xff]
          %v1691 = vld [vmem:[#allocation25] sm:$0xff]
          %v1692 = vld [vmem:[#allocation25 + $0x8] sm:$0xff]
          %v1693 = vld [vmem:[#allocation25 + $0x10] sm:$0xff]
          %v1694 = vld [vmem:[#allocation25 + $0x18] sm:$0xff]
          %v1696 = vsel %vm843, %v1686, 0
          %1698 = vmatprep.subr.mxu0 0.0
          %1699 = vmatpush1.msra.mxu0 %v1691
          %1700 = vmatprep.subr.mxu0 0.0
          %1701 = vmatpush1.msra.mxu0 %v1692
          %1702 = vmatprep.subr.mxu0 0.0
          %1703 = vmatpush1.msra.mxu0 %v1693
          %1704 = vmatprep.subr.mxu0 0.0
          %1705 = vmatpush1.msra.mxu0 %v1694
          %1706 = vmatprep.subr.mxu0 0.0
          %1707 = vmatpush1.msra.mxu0 0.0
          %1708 = vmatprep.subr.mxu0 0.0
          %1709 = vmatpush1.msra.mxu0 0.0
          %1710 = vmatprep.subr.mxu0 0.0
          %1711 = vmatpush1.msra.mxu0 0.0
          %1712 = vmatprep.subr.mxu0 0.0
          %1713 = vmatpush1.msra.mxu0 0.0
          %1714 = vmatprep.subr.mxu0 0.0
          %1715 = vmatpush1.msra.mxu0 0.0
          %1716 = vmatprep.subr.mxu0 0.0
          %1717 = vmatpush1.msra.mxu0 0.0
          %1718 = vmatprep.subr.mxu0 0.0
          %1719 = vmatpush1.msra.mxu0 0.0
          %1720 = vmatprep.subr.mxu0 0.0
          %1721 = vmatpush1.msra.mxu0 0.0
          %1722 = vmatprep.subr.mxu0 0.0
          %1723 = vmatpush1.msra.mxu0 0.0
          %1724 = vmatprep.subr.mxu0 0.0
          %1725 = vmatpush1.msra.mxu0 0.0
          %1726 = vmatprep.subr.mxu0 0.0
          %1727 = vmatpush1.msra.mxu0 0.0
          %1728 = vmatprep.subr.mxu0 0.0
          %1729 = vmatpush1.msra.mxu0 0.0
          %1730 = vmatprep.subr.mxu0 0.0
          %1731 = vmatpush1.msra.mxu0 0.0
          %1732 = vmatprep.subr.mxu0 0.0
          %1733 = vmatpush1.msra.mxu0 0.0
          %1734 = vmatprep.subr.mxu0 0.0
          %1735 = vmatpush1.msra.mxu0 0.0
          %1736 = vmatprep.subr.mxu0 0.0
          %1737 = vmatpush1.msra.mxu0 0.0
          %1738 = vmatprep.subr.mxu0 0.0
          %1739 = vmatpush1.msra.mxu0 0.0
          %1740 = vmatprep.subr.mxu0 0.0
          %1741 = vmatpush1.msra.mxu0 0.0
          %1742 = vmatprep.subr.mxu0 0.0
          %1743 = vmatpush1.msra.mxu0 0.0
          %1744 = vmatprep.subr.mxu0 0.0
          %1745 = vmatpush1.msra.mxu0 0.0
          %1746 = vmatprep.subr.mxu0 0.0
          %1747 = vmatpush1.msra.mxu0 0.0
          %1748 = vmatprep.subr.mxu0 0.0
          %1749 = vmatpush1.msra.mxu0 0.0
          %1750 = vmatprep.subr.mxu0 0.0
          %1751 = vmatpush1.msra.mxu0 0.0
          %1752 = vmatprep.subr.mxu0 0.0
          %1753 = vmatpush1.msra.mxu0 0.0
          %1754 = vmatprep.subr.mxu0 0.0
          %1755 = vmatpush1.msra.mxu0 0.0
          %1756 = vmatprep.subr.mxu0 0.0
          %1757 = vmatpush1.msra.mxu0 0.0
          %1758 = vmatprep.subr.mxu0 0.0
          %1759 = vmatpush1.msra.mxu0 0.0
          %1760 = vmatprep.subr.mxu0 0.0
          %1761 = vmatpush1.msra.mxu0 0.0
          %1762 = vmatprep.mubr.f32.mxu0 0.0
          %1763 = vmatmul.mubr.f32.gmra.mrb[0].mxu0 %v1696
          %v1764 = vpop.f32.mrb[0].mxu0
          %v1765 = vadd.f32 0.0, %v1764
          %v1766 = vpop.f32.mrb[0].mxu0
          %1767 = vdwg.mxu0
          %v1769 = vsel %vm843, %v1685, 0
          %1771 = vmatprep.subr.mxu0 0.0
          %1772 = vmatpush1.msra.mxu0 %v1687
          %1773 = vmatprep.subr.mxu0 0.0
          %1774 = vmatpush1.msra.mxu0 %v1688
          %1775 = vmatprep.subr.mxu0 0.0
          %1776 = vmatpush1.msra.mxu0 %v1689
          %1777 = vmatprep.subr.mxu0 0.0
          %1778 = vmatpush1.msra.mxu0 %v1690
          %1779 = vmatprep.subr.mxu0 0.0
          %1780 = vmatpush1.msra.mxu0 0.0
          %1781 = vmatprep.subr.mxu0 0.0
          %1782 = vmatpush1.msra.mxu0 0.0
          %1783 = vmatprep.subr.mxu0 0.0
          %1784 = vmatpush1.msra.mxu0 0.0
          %1785 = vmatprep.subr.mxu0 0.0
          %1786 = vmatpush1.msra.mxu0 0.0
          %1787 = vmatprep.subr.mxu0 0.0
          %1788 = vmatpush1.msra.mxu0 0.0
          %1789 = vmatprep.subr.mxu0 0.0
          %1790 = vmatpush1.msra.mxu0 0.0
          %1791 = vmatprep.subr.mxu0 0.0
          %1792 = vmatpush1.msra.mxu0 0.0
          %1793 = vmatprep.subr.mxu0 0.0
          %1794 = vmatpush1.msra.mxu0 0.0
          %1795 = vmatprep.subr.mxu0 0.0
          %1796 = vmatpush1.msra.mxu0 0.0
          %1797 = vmatprep.subr.mxu0 0.0
          %1798 = vmatpush1.msra.mxu0 0.0
          %1799 = vmatprep.subr.mxu0 0.0
          %1800 = vmatpush1.msra.mxu0 0.0
          %1801 = vmatprep.subr.mxu0 0.0
          %1802 = vmatpush1.msra.mxu0 0.0
          %1803 = vmatprep.subr.mxu0 0.0
          %1804 = vmatpush1.msra.mxu0 0.0
          %1805 = vmatprep.subr.mxu0 0.0
          %1806 = vmatpush1.msra.mxu0 0.0
          %1807 = vmatprep.subr.mxu0 0.0
          %1808 = vmatpush1.msra.mxu0 0.0
          %1809 = vmatprep.subr.mxu0 0.0
          %1810 = vmatpush1.msra.mxu0 0.0
          %1811 = vmatprep.subr.mxu0 0.0
          %1812 = vmatpush1.msra.mxu0 0.0
          %1813 = vmatprep.subr.mxu0 0.0
          %1814 = vmatpush1.msra.mxu0 0.0
          %1815 = vmatprep.subr.mxu0 0.0
          %1816 = vmatpush1.msra.mxu0 0.0
          %1817 = vmatprep.subr.mxu0 0.0
          %1818 = vmatpush1.msra.mxu0 0.0
          %1819 = vmatprep.subr.mxu0 0.0
          %1820 = vmatpush1.msra.mxu0 0.0
          %1821 = vmatprep.subr.mxu0 0.0
          %1822 = vmatpush1.msra.mxu0 0.0
          %1823 = vmatprep.subr.mxu0 0.0
          %1824 = vmatpush1.msra.mxu0 0.0
          %1825 = vmatprep.subr.mxu0 0.0
          %1826 = vmatpush1.msra.mxu0 0.0
          %1827 = vmatprep.subr.mxu0 0.0
          %1828 = vmatpush1.msra.mxu0 0.0
          %1829 = vmatprep.subr.mxu0 0.0
          %1830 = vmatpush1.msra.mxu0 0.0
          %1831 = vmatprep.subr.mxu0 0.0
          %1832 = vmatpush1.msra.mxu0 0.0
          %1833 = vmatprep.subr.mxu0 0.0
          %1834 = vmatpush1.msra.mxu0 0.0
          %1835 = vmatprep.mubr.f32.mxu0 0.0
          %1836 = vmatmul.mubr.f32.gmra.mrb[0].mxu0 %v1769
          %v1837 = vpop.f32.mrb[0].mxu0
          %v1838 = vadd.f32 %v1765, %v1837
          %v1839 = vpop.f32.mrb[0].mxu0
          %1840 = vdwg.mxu0
          %v1841 = vld [vmem:[#allocation27] sm:$0x1]
          %v1843 = vlaneseq
          %v1844 = vshrl.u32 %v1843, 7
          %v1845 = vsub.s32 0, %v1844
          %v1846 = vrot.slane %v1841, %v1845
          %v1848 = vadd.f32 %v1838, %v1846
          %1849 = vst [vmem:[#allocation28] sm:$0xff] %v1848
        $region116: #{lstm_maxpool_forward.1} parent=63 // pred_fallthru
          _
        // Predicated region
        $region117: #{lstm_maxpool_forward.1} parent=63 // pred_check
          %p1850 = pneg %p310
        $region118: #{lstm_maxpool_forward.1} parent=63 // pred_check_branch
          %1852 = sbr.rel (%p1850) target = $region120
        $region119: #{lstm_maxpool_forward.1} parent=63 // pred_region
          %s1854 = ssub.s32 128, 128
          %1855 = vsyncadd [#allocation12], %s1854
          %s1856 = smul.addr %s37, 128
          %s1857 = scalar_lea.hbm %s11, %s1856
          %s1859 = sshll.u32 [#allocation28], 4
          %s1860 = int_to_ptr.vmem [resolvable:$true] %s1859
          %1862 = dma.vmem_to_hbm [thread:$0]  %s1860, 128, %s1857, [#allocation12]
        $region120: #{lstm_maxpool_forward.1} parent=63 // pred_fallthru
          _
        // Predicated region
        $region121: #{lstm_maxpool_forward.1} parent=63 // pred_check
          %p1863 = pneg %p310
        $region122: #{lstm_maxpool_forward.1} parent=63 // pred_check_branch
          %1865 = sbr.rel (%p1863) target = $region124
        $region123: #{lstm_maxpool_forward.1} parent=63 // pred_region
          %1866 = dma.done [#allocation12], 128
        $region124: #{lstm_maxpool_forward.1} parent=63 // pred_fallthru
          _
      $region64: #{lstm_maxpool_forward.1} parent=5 // pred_fallthru
        _
      %p1867 = scmp.le.s32.totalorder 2, %s28
      // Predicated region
      $region125: #{lstm_maxpool_forward.1} parent=5 // pred_check
        %p1868 = pneg %p1867
      $region126: #{lstm_maxpool_forward.1} parent=5 // pred_check_branch
        %1870 = sbr.rel (%p1868) target = $region128
      $region127: #{lstm_maxpool_forward.1} parent=5 // pred_region
        %s1871 = ssub.s32 %s28, 2
      $region128: #{lstm_maxpool_forward.1} parent=5 // pred_fallthru
        _
    $region6: #{lstm_maxpool_forward.1} parent=1 // loop_footer
      %s32 = sadd.s32 1, %s28
    $region7: #{lstm_maxpool_forward.1} parent=1 // loop_footer_branch
      %27 = sbr.rel target = $region3
    $region8: #{lstm_maxpool_forward.1} parent=1 // loop_exit
      _
    %1872 = vsyncpa [#allocation11], 1
    %s1873 = scalar_lea.sflag [#allocation11], 1
    %1874 = vsyncpa %s1873, 1
    %1875 = vsyncpa [#allocation14], 1
    %s1876 = scalar_lea.sflag [#allocation14], 1
    %1877 = vsyncpa %s1876, 1
    %1878 = vsyncpa [#allocation17], 1
    %1879 = vsyncpa [#allocation20], 1
    %1880 = vsyncpa [#allocation23], 1
    %1881 = vsyncpa [#allocation26], 1
    %1882 = vsyncpa [#allocation12], 1
    %s1883 = scalar_lea.sflag [#allocation12], 1
    %1884 = vsyncpa %s1883, 1

</llo_original>
